<compile_context>
chip_gen: v7x
topology: tpu7x:2x2x1
jax: 0.10.0
libtpu: 0.0.40
codegen_flags: <defaults>
</compile_context>

<pallas_src>
import functools

import jax
import jax.numpy as jnp
import numpy as np
from jax.experimental import pallas as pl
from jax.experimental.pallas import tpu as pltpu

NEG_SLOPE = 0.01   # nn.LeakyReLU default negative_slope
BN_EPS = 1e-6      # norm_layer=partial(nn.BatchNorm2d, eps=1e-06)


def _leaky(y):
    return jnp.where(y >= 0, y, NEG_SLOPE * y)


# ----------------------------- fused Pallas kernel --------------------------

def _conv_trans_block_kernel(
        x_ref, maskx_ref,
        cw1_ref, cb1_ref, cw2_ref, cb2_ref, cw3_ref, cb3_ref,
        fw1_ref, fb1_ref, fw2_ref, fb2_ref, fw3_ref, fb3_ref,
        o_ref, *, H, W, med, outC):
    M = H * W
    x = x_ref[0]                     # [Cin, M]   spatial on the lane axis
    maskx = maskx_ref[...]           # [9*med, M] expanded border masks

    def conv3x3(y1, w2_ref, b2_ref):
        # y1: [med, M].  Build the im2col patch tensor [9*med, M] with lane
        # rolls (padding=1 handled by the masks), then ONE matmul with
        # K = 9*med instead of 9 tiny K=med matmuls.  Masks are applied with a
        # single full-vreg multiply after the concat.
        cols = []
        for t in range(9):
            dy, dx = t // 3 - 1, t % 3 - 1
            s = dy * W + dx
            cols.append(y1 if s == 0 else pltpu.roll(y1, shift=(-s) % M, axis=1))
        patches = jnp.concatenate(cols, axis=0) * maskx          # [9*med, M]
        y = jnp.dot(w2_ref[...], patches,
                    preferred_element_type=jnp.float32) + b2_ref[...]
        return _leaky(y)

    # ---- cnn_block (res_conv=True): conv1 + residual_conv as one matmul ----
    y = jnp.dot(cw1_ref[...], x, preferred_element_type=jnp.float32) + cb1_ref[...]
    res = y[:outC]                                  # bn(residual_conv(x))
    y1 = _leaky(y[outC:outC + med])                 # act1(bn1(conv1(x)))
    y2 = conv3x3(y1, cw2_ref, cb2_ref)              # act2(bn2(conv2(.)))
    xc = _leaky(jnp.dot(cw3_ref[...], y2,
                        preferred_element_type=jnp.float32)
                + cb3_ref[...] + res)               # act3(bn3(conv3(.)) + res)

    # ---- fusion_block (res_conv=False, identity residual) ------------------
    z1 = _leaky(jnp.dot(fw1_ref[...], xc,
                        preferred_element_type=jnp.float32) + fb1_ref[...])
    z2 = conv3x3(z1, fw2_ref, fb2_ref)
    out = _leaky(jnp.dot(fw3_ref[...], z2,
                         preferred_element_type=jnp.float32)
                 + fb3_ref[...] + xc)

    o_ref[0] = out                                  # [outC, M], lane-dense


# ------------------------------- wrappers -----------------------------------

def _make_border_masks_expanded(H, W, med):
    """[9*med, H*W] masks (pad=1 validity per tap, repeated med rows per tap)."""
    m = np.arange(H * W)
    h, w = m // W, m % W
    masks = np.zeros((9, H * W), np.float32)
    for t in range(9):
        dy, dx = t // 3 - 1, t % 3 - 1
        valid = (h + dy >= 0) & (h + dy < H) & (w + dx >= 0) & (w + dx < W)
        masks[t] = valid.astype(np.float32)
    return jnp.asarray(np.repeat(masks, med, axis=0))            # [9*med, H*W]


def _prep_block(p, res_conv):
    """Fold BN scales into conv weights; rearrange to [Cout, Cin] layout."""
    med = p['conv1_w'].shape[1]
    w1 = p['conv1_w'].T * p['bn1_s'].reshape(-1, 1)              # [med, Cin]
    b1 = p['bn1_b'].reshape(-1, 1)
    w2 = (p['conv2_w'].transpose(2, 0, 1).reshape(med, 9 * med)
          * p['bn2_s'].reshape(-1, 1))                           # [med, 9*med]
    b2 = p['bn2_b'].reshape(-1, 1)
    w3 = p['conv3_w'].T * p['bn3_s'].reshape(-1, 1)              # [outC, med]
    b3 = p['bn3_b'].reshape(-1, 1)
    if res_conv:
        wr = p['res_w'].T * p['resbn_s'].reshape(-1, 1)          # [outC, Cin]
        br = p['resbn_b'].reshape(-1, 1)
        w1 = jnp.concatenate([wr, w1], axis=0)   # residual rows first (8-aligned split)
        b1 = jnp.concatenate([br, b1], axis=0)
    return dict(w1=w1, b1=b1, w2=w2, b2=b2, w3=w3, b3=b3)


@jax.jit
def conv_trans_block_forward(x_nchw, params):
    """ConvTransBlock.forward: x,_ = cnn_block(x); x = fusion_block(x)."""
    N, Cin, H, W = x_nchw.shape
    M = H * W
    cp = _prep_block(params['cnn_block'], res_conv=True)
    fp = _prep_block(params['fusion_block'], res_conv=False)
    outC, med = cp['w3'].shape
    # identity residual in the fusion block requires inplanes == outplanes,
    # and both blocks share the same med_planes (same outplanes).
    assert fp['w1'].shape[1] == outC, "fusion_block identity residual needs Cin == Cout"
    assert fp['w3'].shape[1] == med, "both blocks must share med_planes"
    maskx = _make_border_masks_expanded(H, W, med)               # [9*med, M]
    x_flat = x_nchw.reshape(N, Cin, M)                           # NCHW -> [N, C, H*W]

    kern = functools.partial(_conv_trans_block_kernel, H=H, W=W, med=med, outC=outC)
    weights = (cp['w1'], cp['b1'], cp['w2'], cp['b2'], cp['w3'], cp['b3'],
               fp['w1'], fp['b1'], fp['w2'], fp['b2'], fp['w3'], fp['b3'])

    in_specs = [pl.BlockSpec((1, Cin, M), lambda n: (n, 0, 0)),
                pl.BlockSpec((9 * med, M), lambda n: (0, 0))]
    in_specs += [pl.BlockSpec(w.shape, lambda n: (0, 0)) for w in weights]

    out = pl.pallas_call(
        kern,
        grid=(N,),
        in_specs=in_specs,
        out_specs=pl.BlockSpec((1, outC, M), lambda n: (n, 0, 0)),
        out_shape=jax.ShapeDtypeStruct((N, outC, M), jnp.float32),
        compiler_params=pltpu.CompilerParams(dimension_semantics=("parallel",)),
    )(x_flat, maskx, *weights)
    return out.reshape(N, outC, H, W)                            # already NCHW


# --------------------------- plain-JAX reference ----------------------------

def _ref_conv_block(x, p, res_conv):
    def bn(y, s, b):
        return y * s.reshape(1, 1, 1, -1) + b.reshape(1, 1, 1, -1)

    def conv1x1(y, w):
        return jnp.einsum('nhwc,cd->nhwd', y, w)

    def conv3x3(y, w9):
        w = w9.reshape(3, 3, w9.shape[1], w9.shape[2])
        return jax.lax.conv_general_dilated(
            y, w, window_strides=(1, 1), padding='SAME',
            dimension_numbers=('NHWC', 'HWIO', 'NHWC'))

    residual = x
    y = _leaky(bn(conv1x1(x, p['conv1_w']), p['bn1_s'], p['bn1_b']))
    x2 = _leaky(bn(conv3x3(y, p['conv2_w']), p['bn2_s'], p['bn2_b']))
    y = bn(conv1x1(x2, p['conv3_w']), p['bn3_s'], p['bn3_b'])
    if res_conv:
        residual = bn(conv1x1(residual, p['res_w']), p['resbn_s'], p['resbn_b'])
    return _leaky(y + residual)


def conv_trans_block_ref(x_nchw, params):
    x = jnp.transpose(x_nchw, (0, 2, 3, 1))
    x = _ref_conv_block(x, params['cnn_block'], res_conv=True)
    x = _ref_conv_block(x, params['fusion_block'], res_conv=False)
    return jnp.transpose(x, (0, 3, 1, 2))


# ------------------------------ param init ----------------------------------

def _fold_bn(key, C):
    kg, kb, km, kv = jax.random.split(key, 4)
    gamma = jax.random.normal(kg, (C,), jnp.float32) * 0.1 + 1.0
    beta = jax.random.normal(kb, (C,), jnp.float32) * 0.1
    mean = jax.random.normal(km, (C,), jnp.float32) * 0.1
    var = jnp.abs(jax.random.normal(kv, (C,), jnp.float32)) * 0.1 + 0.5
    scale = gamma / jnp.sqrt(var + BN_EPS)
    bias = beta - mean * scale
    return scale.reshape(1, C), bias.reshape(1, C)


def make_conv_block_params(key, inplanes, outplanes, res_conv):
    med = outplanes // 4 if outplanes > 4 else outplanes
    keys = jax.random.split(key, 8)
    p = {}
    p['conv1_w'] = jax.random.normal(keys[0], (inplanes, med), jnp.float32) * 0.2
    p['bn1_s'], p['bn1_b'] = _fold_bn(keys[1], med)
    p['conv2_w'] = jax.random.normal(keys[2], (9, med, med), jnp.float32) * 0.2
    p['bn2_s'], p['bn2_b'] = _fold_bn(keys[3], med)
    p['conv3_w'] = jax.random.normal(keys[4], (med, outplanes), jnp.float32) * 0.2
    p['bn3_s'], p['bn3_b'] = _fold_bn(keys[5], outplanes)
    if res_conv:
        p['res_w'] = jax.random.normal(keys[6], (inplanes, outplanes), jnp.float32) * 0.2
        p['resbn_s'], p['resbn_b'] = _fold_bn(keys[7], outplanes)
    return p


# --------------------------------- main --------------------------------------

if __name__ == "__main__":
    key = jax.random.PRNGKey(0)
    kx, kc, kf = jax.random.split(key, 3)

    inplanes, outplanes, H, W, N = 4, 16, 16, 16, 2
    x = jax.random.normal(kx, (N, inplanes, H, W), jnp.float32)   # NCHW, like PyTorch

    params = {
        'cnn_block': make_conv_block_params(kc, inplanes, outplanes, res_conv=True),
        'fusion_block': make_conv_block_params(kf, outplanes, outplanes, res_conv=False),
    }

    out = jax.block_until_ready(conv_trans_block_forward(x, params))
    ref = jax.block_until_ready(conv_trans_block_ref(x, params))

    assert out.shape == (N, outplanes, H, W), out.shape
    np.testing.assert_allclose(np.asarray(out), np.asarray(ref), rtol=1e-4, atol=1e-4)
    print("KERNEL_OK")
</pallas_src>

<mosaic_0001>
module attributes {stable_mosaic.version = 11 : i64} {
  func.func @_conv_trans_block_kernel(%arg0: i32, %arg1: memref<1x4x256xf32, #tpu.memory_space<vmem>>, %arg2: memref<36x256xf32, #tpu.memory_space<vmem>>, %arg3: memref<20x4xf32, #tpu.memory_space<vmem>>, %arg4: memref<20x1xf32, #tpu.memory_space<vmem>>, %arg5: memref<4x36xf32, #tpu.memory_space<vmem>>, %arg6: memref<4x1xf32, #tpu.memory_space<vmem>>, %arg7: memref<16x4xf32, #tpu.memory_space<vmem>>, %arg8: memref<16x1xf32, #tpu.memory_space<vmem>>, %arg9: memref<4x16xf32, #tpu.memory_space<vmem>>, %arg10: memref<4x1xf32, #tpu.memory_space<vmem>>, %arg11: memref<4x36xf32, #tpu.memory_space<vmem>>, %arg12: memref<4x1xf32, #tpu.memory_space<vmem>>, %arg13: memref<16x4xf32, #tpu.memory_space<vmem>>, %arg14: memref<16x1xf32, #tpu.memory_space<vmem>>, %arg15: memref<1x16x256xf32, #tpu.memory_space<vmem>>) attributes {dimension_semantics = [#tpu.dimension_semantics<parallel>], iteration_bounds = array<i64: 2>, scalar_prefetch = 0 : i64, scratch_operands = 0 : i64, tpu.core_type = #tpu.core_type<tc>, window_params = [{transform_indices = @transform_0, window_bounds = array<i64: 1, 4, 256>}, {pipeline_mode = #tpu.pipeline_mode<synchronous>, transform_indices = @transform_1, window_bounds = array<i64: 36, 256>}, {pipeline_mode = #tpu.pipeline_mode<synchronous>, transform_indices = @transform_2, window_bounds = array<i64: 20, 4>}, {pipeline_mode = #tpu.pipeline_mode<synchronous>, transform_indices = @transform_3, window_bounds = array<i64: 20, 1>}, {pipeline_mode = #tpu.pipeline_mode<synchronous>, transform_indices = @transform_4, window_bounds = array<i64: 4, 36>}, {pipeline_mode = #tpu.pipeline_mode<synchronous>, transform_indices = @transform_5, window_bounds = array<i64: 4, 1>}, {pipeline_mode = #tpu.pipeline_mode<synchronous>, transform_indices = @transform_6, window_bounds = array<i64: 16, 4>}, {pipeline_mode = #tpu.pipeline_mode<synchronous>, transform_indices = @transform_7, window_bounds = array<i64: 16, 1>}, {pipeline_mode = #tpu.pipeline_mode<synchronous>, transform_indices = @transform_8, window_bounds = array<i64: 4, 16>}, {pipeline_mode = #tpu.pipeline_mode<synchronous>, transform_indices = @transform_9, window_bounds = array<i64: 4, 1>}, {pipeline_mode = #tpu.pipeline_mode<synchronous>, transform_indices = @transform_10, window_bounds = array<i64: 4, 36>}, {pipeline_mode = #tpu.pipeline_mode<synchronous>, transform_indices = @transform_11, window_bounds = array<i64: 4, 1>}, {pipeline_mode = #tpu.pipeline_mode<synchronous>, transform_indices = @transform_12, window_bounds = array<i64: 16, 4>}, {pipeline_mode = #tpu.pipeline_mode<synchronous>, transform_indices = @transform_13, window_bounds = array<i64: 16, 1>}, {transform_indices = @transform_14, window_bounds = array<i64: 1, 16, 256>}]} {
    %c0 = arith.constant 0 : index
    %c0_0 = arith.constant 0 : index
    %c0_1 = arith.constant 0 : index
    %0 = vector.load %arg1[%c0, %c0_0, %c0_1] : memref<1x4x256xf32, #tpu.memory_space<vmem>>, vector<1x4x256xf32>
    %1 = vector.shape_cast %0 : vector<1x4x256xf32> to vector<4x256xf32>
    %c0_2 = arith.constant 0 : index
    %c0_3 = arith.constant 0 : index
    %2 = vector.load %arg2[%c0_2, %c0_3] : memref<36x256xf32, #tpu.memory_space<vmem>>, vector<36x256xf32>
    %c0_4 = arith.constant 0 : index
    %c0_5 = arith.constant 0 : index
    %3 = vector.load %arg3[%c0_4, %c0_5] : memref<20x4xf32, #tpu.memory_space<vmem>>, vector<20x4xf32>
    %cst = arith.constant dense<0.000000e+00> : vector<20x256xf32>
    %4 = tpu.matmul %3, %1, %cst {dimension_numbers = #tpu.dot_dimension_numbers<[1], [0], [0], [1], [0, 0, 1, 1], [], []>} : vector<20x4xf32>, vector<4x256xf32>, vector<20x256xf32> -> vector<20x256xf32>
    %c0_6 = arith.constant 0 : index
    %c0_7 = arith.constant 0 : index
    %5 = vector.load %arg4[%c0_6, %c0_7] : memref<20x1xf32, #tpu.memory_space<vmem>>, vector<20x1xf32>
    %6 = vector.broadcast %5 : vector<20x1xf32> to vector<20x256xf32>
    %7 = arith.addf %4, %6 : vector<20x256xf32>
    %8 = vector.extract_strided_slice %7 {offsets = [0, 0], sizes = [16, 256], strides = [1, 1]} : vector<20x256xf32> to vector<16x256xf32>
    %9 = vector.extract_strided_slice %7 {offsets = [16, 0], sizes = [4, 256], strides = [1, 1]} : vector<20x256xf32> to vector<4x256xf32>
    %cst_8 = arith.constant 0.000000e+00 : f32
    %10 = vector.broadcast %cst_8 : f32 to vector<4x256xf32>
    %11 = arith.cmpf oge, %9, %10 : vector<4x256xf32>
    %cst_9 = arith.constant 0.00999999977 : f32
    %12 = vector.broadcast %cst_9 : f32 to vector<4x256xf32>
    %13 = arith.mulf %12, %9 : vector<4x256xf32>
    %14 = arith.select %11, %9, %13 : vector<4x256xi1>, vector<4x256xf32>
    %c17_i32 = arith.constant 17 : i32
    %15 = tpu.dynamic_rotate %14 by %c17_i32 dim 1 : vector<4x256xf32>, i32 -> vector<4x256xf32>
    %c16_i32 = arith.constant 16 : i32
    %16 = tpu.dynamic_rotate %14 by %c16_i32 dim 1 : vector<4x256xf32>, i32 -> vector<4x256xf32>
    %c15_i32 = arith.constant 15 : i32
    %17 = tpu.dynamic_rotate %14 by %c15_i32 dim 1 : vector<4x256xf32>, i32 -> vector<4x256xf32>
    %c1_i32 = arith.constant 1 : i32
    %18 = tpu.dynamic_rotate %14 by %c1_i32 dim 1 : vector<4x256xf32>, i32 -> vector<4x256xf32>
    %c255_i32 = arith.constant 255 : i32
    %19 = tpu.dynamic_rotate %14 by %c255_i32 dim 1 : vector<4x256xf32>, i32 -> vector<4x256xf32>
    %c241_i32 = arith.constant 241 : i32
    %20 = tpu.dynamic_rotate %14 by %c241_i32 dim 1 : vector<4x256xf32>, i32 -> vector<4x256xf32>
    %c240_i32 = arith.constant 240 : i32
    %21 = tpu.dynamic_rotate %14 by %c240_i32 dim 1 : vector<4x256xf32>, i32 -> vector<4x256xf32>
    %c239_i32 = arith.constant 239 : i32
    %22 = tpu.dynamic_rotate %14 by %c239_i32 dim 1 : vector<4x256xf32>, i32 -> vector<4x256xf32>
    %23 = tpu.concatenate %15, %16, %17, %18, %14, %19, %20, %21, %22 in 0 : vector<4x256xf32>, vector<4x256xf32>, vector<4x256xf32>, vector<4x256xf32>, vector<4x256xf32>, vector<4x256xf32>, vector<4x256xf32>, vector<4x256xf32>, vector<4x256xf32> -> vector<36x256xf32>
    %24 = arith.mulf %23, %2 : vector<36x256xf32>
    %c0_10 = arith.constant 0 : index
    %c0_11 = arith.constant 0 : index
    %25 = vector.load %arg5[%c0_10, %c0_11] : memref<4x36xf32, #tpu.memory_space<vmem>>, vector<4x36xf32>
    %cst_12 = arith.constant dense<0.000000e+00> : vector<4x256xf32>
    %26 = tpu.matmul %25, %24, %cst_12 {dimension_numbers = #tpu.dot_dimension_numbers<[1], [0], [0], [1], [0, 0, 1, 1], [], []>} : vector<4x36xf32>, vector<36x256xf32>, vector<4x256xf32> -> vector<4x256xf32>
    %c0_13 = arith.constant 0 : index
    %c0_14 = arith.constant 0 : index
    %27 = vector.load %arg6[%c0_13, %c0_14] : memref<4x1xf32, #tpu.memory_space<vmem>>, vector<4x1xf32>
    %28 = vector.broadcast %27 : vector<4x1xf32> to vector<4x256xf32>
    %29 = arith.addf %26, %28 : vector<4x256xf32>
    %cst_15 = arith.constant 0.000000e+00 : f32
    %30 = vector.broadcast %cst_15 : f32 to vector<4x256xf32>
    %31 = arith.cmpf oge, %29, %30 : vector<4x256xf32>
    %cst_16 = arith.constant 0.00999999977 : f32
    %32 = vector.broadcast %cst_16 : f32 to vector<4x256xf32>
    %33 = arith.mulf %32, %29 : vector<4x256xf32>
    %34 = arith.select %31, %29, %33 : vector<4x256xi1>, vector<4x256xf32>
    %c0_17 = arith.constant 0 : index
    %c0_18 = arith.constant 0 : index
    %35 = vector.load %arg7[%c0_17, %c0_18] : memref<16x4xf32, #tpu.memory_space<vmem>>, vector<16x4xf32>
    %cst_19 = arith.constant dense<0.000000e+00> : vector<16x256xf32>
    %36 = tpu.matmul %35, %34, %cst_19 {dimension_numbers = #tpu.dot_dimension_numbers<[1], [0], [0], [1], [0, 0, 1, 1], [], []>} : vector<16x4xf32>, vector<4x256xf32>, vector<16x256xf32> -> vector<16x256xf32>
    %c0_20 = arith.constant 0 : index
    %c0_21 = arith.constant 0 : index
    %37 = vector.load %arg8[%c0_20, %c0_21] : memref<16x1xf32, #tpu.memory_space<vmem>>, vector<16x1xf32>
    %38 = vector.broadcast %37 : vector<16x1xf32> to vector<16x256xf32>
    %39 = arith.addf %36, %38 : vector<16x256xf32>
    %40 = arith.addf %39, %8 : vector<16x256xf32>
    %cst_22 = arith.constant 0.000000e+00 : f32
    %41 = vector.broadcast %cst_22 : f32 to vector<16x256xf32>
    %42 = arith.cmpf oge, %40, %41 : vector<16x256xf32>
    %cst_23 = arith.constant 0.00999999977 : f32
    %43 = vector.broadcast %cst_23 : f32 to vector<16x256xf32>
    %44 = arith.mulf %43, %40 : vector<16x256xf32>
    %45 = arith.select %42, %40, %44 : vector<16x256xi1>, vector<16x256xf32>
    %c0_24 = arith.constant 0 : index
    %c0_25 = arith.constant 0 : index
    %46 = vector.load %arg9[%c0_24, %c0_25] : memref<4x16xf32, #tpu.memory_space<vmem>>, vector<4x16xf32>
    %cst_26 = arith.constant dense<0.000000e+00> : vector<4x256xf32>
    %47 = tpu.matmul %46, %45, %cst_26 {dimension_numbers = #tpu.dot_dimension_numbers<[1], [0], [0], [1], [0, 0, 1, 1], [], []>} : vector<4x16xf32>, vector<16x256xf32>, vector<4x256xf32> -> vector<4x256xf32>
    %c0_27 = arith.constant 0 : index
    %c0_28 = arith.constant 0 : index
    %48 = vector.load %arg10[%c0_27, %c0_28] : memref<4x1xf32, #tpu.memory_space<vmem>>, vector<4x1xf32>
    %49 = vector.broadcast %48 : vector<4x1xf32> to vector<4x256xf32>
    %50 = arith.addf %47, %49 : vector<4x256xf32>
    %cst_29 = arith.constant 0.000000e+00 : f32
    %51 = vector.broadcast %cst_29 : f32 to vector<4x256xf32>
    %52 = arith.cmpf oge, %50, %51 : vector<4x256xf32>
    %cst_30 = arith.constant 0.00999999977 : f32
    %53 = vector.broadcast %cst_30 : f32 to vector<4x256xf32>
    %54 = arith.mulf %53, %50 : vector<4x256xf32>
    %55 = arith.select %52, %50, %54 : vector<4x256xi1>, vector<4x256xf32>
    %c17_i32_31 = arith.constant 17 : i32
    %56 = tpu.dynamic_rotate %55 by %c17_i32_31 dim 1 : vector<4x256xf32>, i32 -> vector<4x256xf32>
    %c16_i32_32 = arith.constant 16 : i32
    %57 = tpu.dynamic_rotate %55 by %c16_i32_32 dim 1 : vector<4x256xf32>, i32 -> vector<4x256xf32>
    %c15_i32_33 = arith.constant 15 : i32
    %58 = tpu.dynamic_rotate %55 by %c15_i32_33 dim 1 : vector<4x256xf32>, i32 -> vector<4x256xf32>
    %c1_i32_34 = arith.constant 1 : i32
    %59 = tpu.dynamic_rotate %55 by %c1_i32_34 dim 1 : vector<4x256xf32>, i32 -> vector<4x256xf32>
    %c255_i32_35 = arith.constant 255 : i32
    %60 = tpu.dynamic_rotate %55 by %c255_i32_35 dim 1 : vector<4x256xf32>, i32 -> vector<4x256xf32>
    %c241_i32_36 = arith.constant 241 : i32
    %61 = tpu.dynamic_rotate %55 by %c241_i32_36 dim 1 : vector<4x256xf32>, i32 -> vector<4x256xf32>
    %c240_i32_37 = arith.constant 240 : i32
    %62 = tpu.dynamic_rotate %55 by %c240_i32_37 dim 1 : vector<4x256xf32>, i32 -> vector<4x256xf32>
    %c239_i32_38 = arith.constant 239 : i32
    %63 = tpu.dynamic_rotate %55 by %c239_i32_38 dim 1 : vector<4x256xf32>, i32 -> vector<4x256xf32>
    %64 = tpu.concatenate %56, %57, %58, %59, %55, %60, %61, %62, %63 in 0 : vector<4x256xf32>, vector<4x256xf32>, vector<4x256xf32>, vector<4x256xf32>, vector<4x256xf32>, vector<4x256xf32>, vector<4x256xf32>, vector<4x256xf32>, vector<4x256xf32> -> vector<36x256xf32>
    %65 = arith.mulf %64, %2 : vector<36x256xf32>
    %c0_39 = arith.constant 0 : index
    %c0_40 = arith.constant 0 : index
    %66 = vector.load %arg11[%c0_39, %c0_40] : memref<4x36xf32, #tpu.memory_space<vmem>>, vector<4x36xf32>
    %cst_41 = arith.constant dense<0.000000e+00> : vector<4x256xf32>
    %67 = tpu.matmul %66, %65, %cst_41 {dimension_numbers = #tpu.dot_dimension_numbers<[1], [0], [0], [1], [0, 0, 1, 1], [], []>} : vector<4x36xf32>, vector<36x256xf32>, vector<4x256xf32> -> vector<4x256xf32>
    %c0_42 = arith.constant 0 : index
    %c0_43 = arith.constant 0 : index
    %68 = vector.load %arg12[%c0_42, %c0_43] : memref<4x1xf32, #tpu.memory_space<vmem>>, vector<4x1xf32>
    %69 = vector.broadcast %68 : vector<4x1xf32> to vector<4x256xf32>
    %70 = arith.addf %67, %69 : vector<4x256xf32>
    %cst_44 = arith.constant 0.000000e+00 : f32
    %71 = vector.broadcast %cst_44 : f32 to vector<4x256xf32>
    %72 = arith.cmpf oge, %70, %71 : vector<4x256xf32>
    %cst_45 = arith.constant 0.00999999977 : f32
    %73 = vector.broadcast %cst_45 : f32 to vector<4x256xf32>
    %74 = arith.mulf %73, %70 : vector<4x256xf32>
    %75 = arith.select %72, %70, %74 : vector<4x256xi1>, vector<4x256xf32>
    %c0_46 = arith.constant 0 : index
    %c0_47 = arith.constant 0 : index
    %76 = vector.load %arg13[%c0_46, %c0_47] : memref<16x4xf32, #tpu.memory_space<vmem>>, vector<16x4xf32>
    %cst_48 = arith.constant dense<0.000000e+00> : vector<16x256xf32>
    %77 = tpu.matmul %76, %75, %cst_48 {dimension_numbers = #tpu.dot_dimension_numbers<[1], [0], [0], [1], [0, 0, 1, 1], [], []>} : vector<16x4xf32>, vector<4x256xf32>, vector<16x256xf32> -> vector<16x256xf32>
    %c0_49 = arith.constant 0 : index
    %c0_50 = arith.constant 0 : index
    %78 = vector.load %arg14[%c0_49, %c0_50] : memref<16x1xf32, #tpu.memory_space<vmem>>, vector<16x1xf32>
    %79 = vector.broadcast %78 : vector<16x1xf32> to vector<16x256xf32>
    %80 = arith.addf %77, %79 : vector<16x256xf32>
    %81 = arith.addf %80, %45 : vector<16x256xf32>
    %cst_51 = arith.constant 0.000000e+00 : f32
    %82 = vector.broadcast %cst_51 : f32 to vector<16x256xf32>
    %83 = arith.cmpf oge, %81, %82 : vector<16x256xf32>
    %cst_52 = arith.constant 0.00999999977 : f32
    %84 = vector.broadcast %cst_52 : f32 to vector<16x256xf32>
    %85 = arith.mulf %84, %81 : vector<16x256xf32>
    %86 = arith.select %83, %81, %85 : vector<16x256xi1>, vector<16x256xf32>
    %c0_53 = arith.constant 0 : index
    %c0_54 = arith.constant 0 : index
    %c0_55 = arith.constant 0 : index
    %87 = vector.load %arg15[%c0_53, %c0_54, %c0_55] : memref<1x16x256xf32, #tpu.memory_space<vmem>>, vector<1x16x256xf32>
    %88 = vector.shape_cast %87 : vector<1x16x256xf32> to vector<16x256xf32>
    %89 = vector.shape_cast %86 : vector<16x256xf32> to vector<1x16x256xf32>
    tpu.vector_store %arg15[%c0_53, %c0_54, %c0_55], %89 {strides = array<i32>} : memref<1x16x256xf32, #tpu.memory_space<vmem>>, vector<1x16x256xf32>,
    return
  }
  func.func @transform_0(%arg0: i32) -> (i32, i32, i32) {
    %c0_i32 = arith.constant 0 : i32
    %c0_i32_0 = arith.constant 0 : i32
    %c0_i32_1 = arith.constant 0 : i32
    return %arg0, %c0_i32, %c0_i32_0 : i32, i32, i32
  }
  func.func @transform_1(%arg0: i32) -> (i32, i32) {
    %c0_i32 = arith.constant 0 : i32
    %c0_i32_0 = arith.constant 0 : i32
    %c0_i32_1 = arith.constant 0 : i32
    return %c0_i32, %c0_i32_0 : i32, i32
  }
  func.func @transform_2(%arg0: i32) -> (i32, i32) {
    %c0_i32 = arith.constant 0 : i32
    %c0_i32_0 = arith.constant 0 : i32
    %c0_i32_1 = arith.constant 0 : i32
    return %c0_i32, %c0_i32_0 : i32, i32
  }
  func.func @transform_3(%arg0: i32) -> (i32, i32) {
    %c0_i32 = arith.constant 0 : i32
    %c0_i32_0 = arith.constant 0 : i32
    %c0_i32_1 = arith.constant 0 : i32
    return %c0_i32, %c0_i32_0 : i32, i32
  }
  func.func @transform_4(%arg0: i32) -> (i32, i32) {
    %c0_i32 = arith.constant 0 : i32
    %c0_i32_0 = arith.constant 0 : i32
    %c0_i32_1 = arith.constant 0 : i32
    return %c0_i32, %c0_i32_0 : i32, i32
  }
  func.func @transform_5(%arg0: i32) -> (i32, i32) {
    %c0_i32 = arith.constant 0 : i32
    %c0_i32_0 = arith.constant 0 : i32
    %c0_i32_1 = arith.constant 0 : i32
    return %c0_i32, %c0_i32_0 : i32, i32
  }
  func.func @transform_6(%arg0: i32) -> (i32, i32) {
    %c0_i32 = arith.constant 0 : i32
    %c0_i32_0 = arith.constant 0 : i32
    %c0_i32_1 = arith.constant 0 : i32
    return %c0_i32, %c0_i32_0 : i32, i32
  }
  func.func @transform_7(%arg0: i32) -> (i32, i32) {
    %c0_i32 = arith.constant 0 : i32
    %c0_i32_0 = arith.constant 0 : i32
    %c0_i32_1 = arith.constant 0 : i32
    return %c0_i32, %c0_i32_0 : i32, i32
  }
  func.func @transform_8(%arg0: i32) -> (i32, i32) {
    %c0_i32 = arith.constant 0 : i32
    %c0_i32_0 = arith.constant 0 : i32
    %c0_i32_1 = arith.constant 0 : i32
    return %c0_i32, %c0_i32_0 : i32, i32
  }
  func.func @transform_9(%arg0: i32) -> (i32, i32) {
    %c0_i32 = arith.constant 0 : i32
    %c0_i32_0 = arith.constant 0 : i32
    %c0_i32_1 = arith.constant 0 : i32
    return %c0_i32, %c0_i32_0 : i32, i32
  }
  func.func @transform_10(%arg0: i32) -> (i32, i32) {
    %c0_i32 = arith.constant 0 : i32
    %c0_i32_0 = arith.constant 0 : i32
    %c0_i32_1 = arith.constant 0 : i32
    return %c0_i32, %c0_i32_0 : i32, i32
  }
  func.func @transform_11(%arg0: i32) -> (i32, i32) {
    %c0_i32 = arith.constant 0 : i32
    %c0_i32_0 = arith.constant 0 : i32
    %c0_i32_1 = arith.constant 0 : i32
    return %c0_i32, %c0_i32_0 : i32, i32
  }
  func.func @transform_12(%arg0: i32) -> (i32, i32) {
    %c0_i32 = arith.constant 0 : i32
    %c0_i32_0 = arith.constant 0 : i32
    %c0_i32_1 = arith.constant 0 : i32
    return %c0_i32, %c0_i32_0 : i32, i32
  }
  func.func @transform_13(%arg0: i32) -> (i32, i32) {
    %c0_i32 = arith.constant 0 : i32
    %c0_i32_0 = arith.constant 0 : i32
    %c0_i32_1 = arith.constant 0 : i32
    return %c0_i32, %c0_i32_0 : i32, i32
  }
  func.func @transform_14(%arg0: i32) -> (i32, i32, i32) {
    %c0_i32 = arith.constant 0 : i32
    %c0_i32_0 = arith.constant 0 : i32
    %c0_i32_1 = arith.constant 0 : i32
    return %arg0, %c0_i32, %c0_i32_0 : i32, i32, i32
  }
}

</mosaic_0001>

<llo_original>
// kernel: conv_trans_block_forward.1
$region0: #{conv_trans_block_forward.1}
  #allocation0 [shape = 'u32[]', space=smem, size = 0x4, offset = 0x4, fixed_abs, tag = 'smem constant byte address 0x4 - core index']
  #allocation1 [shape = 'u32[144,128]{1,0:T(1,128)}', space=vmem, size = 0x12000, scoped, tag = 'internal scratch']
  %s0 = inlined_call_operand.vmem [shape: f32[2,4,256], index: 0, kind: input, shape index: {}]
  %s1 = inlined_call_operand.vmem [shape: f32[36,256], index: 1, kind: input, shape index: {}]
  %s2 = inlined_call_operand.vmem [shape: f32[20,4], index: 2, kind: input, shape index: {}]
  %s3 = inlined_call_operand.vmem [shape: f32[20,1], index: 3, kind: input, shape index: {}]
  %s4 = inlined_call_operand.vmem [shape: f32[4,36], index: 4, kind: input, shape index: {}]
  %s5 = inlined_call_operand.vmem [shape: f32[4,1], index: 5, kind: input, shape index: {}]
  %s6 = inlined_call_operand.vmem [shape: f32[16,4], index: 6, kind: input, shape index: {}]
  %s7 = inlined_call_operand.vmem [shape: f32[16,1], index: 7, kind: input, shape index: {}]
  %s8 = inlined_call_operand.vmem [shape: f32[4,16], index: 8, kind: input, shape index: {}]
  %s9 = inlined_call_operand.vmem [shape: f32[4,1], index: 9, kind: input, shape index: {}]
  %s10 = inlined_call_operand.vmem [shape: f32[4,36], index: 10, kind: input, shape index: {}]
  %s11 = inlined_call_operand.vmem [shape: f32[4,1], index: 11, kind: input, shape index: {}]
  %s12 = inlined_call_operand.vmem [shape: f32[16,4], index: 12, kind: input, shape index: {}]
  %s13 = inlined_call_operand.vmem [shape: f32[16,1], index: 13, kind: input, shape index: {}]
  %s14 = inlined_call_operand.vmem [shape: f32[2,16,256], index: 14, kind: output, shape index: {}]
  %s15 = sld [smem:[#allocation0]]
  $region89: #{conv_trans_block_forward.1} parent=0
    _
  %s17 = ssub.s32 1, %s15
  %s18 = scalar_select 0, %s17, %s15
  loop: start=0, step=1, limit=4
  $region2: #{conv_trans_block_forward.1} parent=0 // loop_pre_header
    _
  $region3: #{conv_trans_block_forward.1} parent=0 // loop_header
    %s20 = sphi 0, %s24
    %p21 = scmp.ge.s32.totalorder %s20, 4
    %s30 = sphi 0, %s32
    %s33 = sphi 0, %s30
    %s34 = sphi 0, %s33
    %s50 = sphi 0, %s34
    %s54 = sphi 0, %s54
    %s56 = sphi 0, %s54
    %s57 = sphi 0, %s56
    %s71 = sphi 0, %s57
    %s75 = sphi 0, %s75
    %s77 = sphi 0, %s75
    %s78 = sphi 0, %s77
    %s92 = sphi 0, %s78
    %s96 = sphi 0, %s96
    %s98 = sphi 0, %s96
    %s99 = sphi 0, %s98
    %s113 = sphi 0, %s99
    %s117 = sphi 0, %s117
    %s119 = sphi 0, %s117
    %s120 = sphi 0, %s119
    %s134 = sphi 0, %s120
    %s138 = sphi 0, %s138
    %s140 = sphi 0, %s138
    %s141 = sphi 0, %s140
    %s155 = sphi 0, %s141
    %s159 = sphi 0, %s159
    %s161 = sphi 0, %s159
    %s162 = sphi 0, %s161
    %s176 = sphi 0, %s162
    %s180 = sphi 0, %s180
    %s182 = sphi 0, %s180
    %s183 = sphi 0, %s182
    %s197 = sphi 0, %s183
    %s201 = sphi 0, %s201
    %s203 = sphi 0, %s201
    %s204 = sphi 0, %s203
    %s218 = sphi 0, %s204
    %s222 = sphi 0, %s222
    %s224 = sphi 0, %s222
    %s225 = sphi 0, %s224
    %s239 = sphi 0, %s225
    %s243 = sphi 0, %s243
    %s245 = sphi 0, %s243
    %s246 = sphi 0, %s245
    %s260 = sphi 0, %s246
    %s264 = sphi 0, %s264
    %s266 = sphi 0, %s264
    %s267 = sphi 0, %s266
    %s281 = sphi 0, %s267
    %s285 = sphi 0, %s285
    %s287 = sphi 0, %s285
    %s288 = sphi 0, %s287
    %s302 = sphi 0, %s288
    %s306 = sphi 0, %s306
    %s308 = sphi 0, %s306
    %s309 = sphi 0, %s308
    %s323 = sphi 0, %s309
    %s329 = sphi 0, %s331
    %s332 = sphi 0, %s329
    %s333 = sphi 0, %s332
    %s349 = sphi 0, %s333
  $region4: #{conv_trans_block_forward.1} parent=0 // loop_header_branch
    %23 = sbr.rel (%p21) target = $region8
  $region5: #{conv_trans_block_forward.1} parent=0 // loop_body
    %s25 = ssub.s32 %s20, 1
    %s26 = ssub.s32 %s20, 2
    %s27 = sadd.s32 %s20, 1
    %s28 = ssub.s32 %s20, %s27
    %p29 = scmp.eq.s32.totalorder %s28, 0
    %s31 = sadd.s32 %s30, 1
    %s32 = scalar_select %p29, %s30, %s31
    %p35 = pneg %p29
    %p36 = scmp.eq.s32.totalorder %s20, 1
    %p37 = por %p35, %p36
    %p38 = scmp.ne.s32.totalorder %s30, %s33
    %p39 = scmp.eq.s32.totalorder %s20, 0
    %p40 = por %p38, %p39
    %p41 = scmp.ne.s32.totalorder %s30, %s33
    %p42 = scmp.eq.s32.totalorder %s25, 1
    %p43 = por %p41, %p42
    %p44 = scmp.ne.s32.totalorder %s33, %s34
    %p45 = scmp.eq.s32.totalorder %s25, 0
    %p46 = por %p44, %p45
    %p47 = scmp.ne.s32.totalorder %s33, %s34
    %p48 = scmp.eq.s32.totalorder %s26, 1
    %p49 = por %p47, %p48
    %p51 = scmp.ne.s32.totalorder %s34, %s50
    %p52 = scmp.eq.s32.totalorder %s26, 0
    %p53 = por %p51, %p52
    %s55 = sadd.s32 %s54, 1
    %p58 = scmp.eq.s32.totalorder %s20, 1
    %p59 = scmp.ne.s32.totalorder %s54, %s56
    %p60 = scmp.eq.s32.totalorder %s20, 0
    %p61 = por %p59, %p60
    %p62 = scmp.ne.s32.totalorder %s54, %s56
    %p63 = scmp.eq.s32.totalorder %s25, 1
    %p64 = por %p62, %p63
    %p65 = scmp.ne.s32.totalorder %s56, %s57
    %p66 = scmp.eq.s32.totalorder %s25, 0
    %p67 = por %p65, %p66
    %p68 = scmp.ne.s32.totalorder %s56, %s57
    %p69 = scmp.eq.s32.totalorder %s26, 1
    %p70 = por %p68, %p69
    %p72 = scmp.ne.s32.totalorder %s57, %s71
    %p73 = scmp.eq.s32.totalorder %s26, 0
    %p74 = por %p72, %p73
    %s76 = sadd.s32 %s75, 1
    %p79 = scmp.eq.s32.totalorder %s20, 1
    %p80 = scmp.ne.s32.totalorder %s75, %s77
    %p81 = scmp.eq.s32.totalorder %s20, 0
    %p82 = por %p80, %p81
    %p83 = scmp.ne.s32.totalorder %s75, %s77
    %p84 = scmp.eq.s32.totalorder %s25, 1
    %p85 = por %p83, %p84
    %p86 = scmp.ne.s32.totalorder %s77, %s78
    %p87 = scmp.eq.s32.totalorder %s25, 0
    %p88 = por %p86, %p87
    %p89 = scmp.ne.s32.totalorder %s77, %s78
    %p90 = scmp.eq.s32.totalorder %s26, 1
    %p91 = por %p89, %p90
    %p93 = scmp.ne.s32.totalorder %s78, %s92
    %p94 = scmp.eq.s32.totalorder %s26, 0
    %p95 = por %p93, %p94
    %s97 = sadd.s32 %s96, 1
    %p100 = scmp.eq.s32.totalorder %s20, 1
    %p101 = scmp.ne.s32.totalorder %s96, %s98
    %p102 = scmp.eq.s32.totalorder %s20, 0
    %p103 = por %p101, %p102
    %p104 = scmp.ne.s32.totalorder %s96, %s98
    %p105 = scmp.eq.s32.totalorder %s25, 1
    %p106 = por %p104, %p105
    %p107 = scmp.ne.s32.totalorder %s98, %s99
    %p108 = scmp.eq.s32.totalorder %s25, 0
    %p109 = por %p107, %p108
    %p110 = scmp.ne.s32.totalorder %s98, %s99
    %p111 = scmp.eq.s32.totalorder %s26, 1
    %p112 = por %p110, %p111
    %p114 = scmp.ne.s32.totalorder %s99, %s113
    %p115 = scmp.eq.s32.totalorder %s26, 0
    %p116 = por %p114, %p115
    %s118 = sadd.s32 %s117, 1
    %p121 = scmp.eq.s32.totalorder %s20, 1
    %p122 = scmp.ne.s32.totalorder %s117, %s119
    %p123 = scmp.eq.s32.totalorder %s20, 0
    %p124 = por %p122, %p123
    %p125 = scmp.ne.s32.totalorder %s117, %s119
    %p126 = scmp.eq.s32.totalorder %s25, 1
    %p127 = por %p125, %p126
    %p128 = scmp.ne.s32.totalorder %s119, %s120
    %p129 = scmp.eq.s32.totalorder %s25, 0
    %p130 = por %p128, %p129
    %p131 = scmp.ne.s32.totalorder %s119, %s120
    %p132 = scmp.eq.s32.totalorder %s26, 1
    %p133 = por %p131, %p132
    %p135 = scmp.ne.s32.totalorder %s120, %s134
    %p136 = scmp.eq.s32.totalorder %s26, 0
    %p137 = por %p135, %p136
    %s139 = sadd.s32 %s138, 1
    %p142 = scmp.eq.s32.totalorder %s20, 1
    %p143 = scmp.ne.s32.totalorder %s138, %s140
    %p144 = scmp.eq.s32.totalorder %s20, 0
    %p145 = por %p143, %p144
    %p146 = scmp.ne.s32.totalorder %s138, %s140
    %p147 = scmp.eq.s32.totalorder %s25, 1
    %p148 = por %p146, %p147
    %p149 = scmp.ne.s32.totalorder %s140, %s141
    %p150 = scmp.eq.s32.totalorder %s25, 0
    %p151 = por %p149, %p150
    %p152 = scmp.ne.s32.totalorder %s140, %s141
    %p153 = scmp.eq.s32.totalorder %s26, 1
    %p154 = por %p152, %p153
    %p156 = scmp.ne.s32.totalorder %s141, %s155
    %p157 = scmp.eq.s32.totalorder %s26, 0
    %p158 = por %p156, %p157
    %s160 = sadd.s32 %s159, 1
    %p163 = scmp.eq.s32.totalorder %s20, 1
    %p164 = scmp.ne.s32.totalorder %s159, %s161
    %p165 = scmp.eq.s32.totalorder %s20, 0
    %p166 = por %p164, %p165
    %p167 = scmp.ne.s32.totalorder %s159, %s161
    %p168 = scmp.eq.s32.totalorder %s25, 1
    %p169 = por %p167, %p168
    %p170 = scmp.ne.s32.totalorder %s161, %s162
    %p171 = scmp.eq.s32.totalorder %s25, 0
    %p172 = por %p170, %p171
    %p173 = scmp.ne.s32.totalorder %s161, %s162
    %p174 = scmp.eq.s32.totalorder %s26, 1
    %p175 = por %p173, %p174
    %p177 = scmp.ne.s32.totalorder %s162, %s176
    %p178 = scmp.eq.s32.totalorder %s26, 0
    %p179 = por %p177, %p178
    %s181 = sadd.s32 %s180, 1
    %p184 = scmp.eq.s32.totalorder %s20, 1
    %p185 = scmp.ne.s32.totalorder %s180, %s182
    %p186 = scmp.eq.s32.totalorder %s20, 0
    %p187 = por %p185, %p186
    %p188 = scmp.ne.s32.totalorder %s180, %s182
    %p189 = scmp.eq.s32.totalorder %s25, 1
    %p190 = por %p188, %p189
    %p191 = scmp.ne.s32.totalorder %s182, %s183
    %p192 = scmp.eq.s32.totalorder %s25, 0
    %p193 = por %p191, %p192
    %p194 = scmp.ne.s32.totalorder %s182, %s183
    %p195 = scmp.eq.s32.totalorder %s26, 1
    %p196 = por %p194, %p195
    %p198 = scmp.ne.s32.totalorder %s183, %s197
    %p199 = scmp.eq.s32.totalorder %s26, 0
    %p200 = por %p198, %p199
    %s202 = sadd.s32 %s201, 1
    %p205 = scmp.eq.s32.totalorder %s20, 1
    %p206 = scmp.ne.s32.totalorder %s201, %s203
    %p207 = scmp.eq.s32.totalorder %s20, 0
    %p208 = por %p206, %p207
    %p209 = scmp.ne.s32.totalorder %s201, %s203
    %p210 = scmp.eq.s32.totalorder %s25, 1
    %p211 = por %p209, %p210
    %p212 = scmp.ne.s32.totalorder %s203, %s204
    %p213 = scmp.eq.s32.totalorder %s25, 0
    %p214 = por %p212, %p213
    %p215 = scmp.ne.s32.totalorder %s203, %s204
    %p216 = scmp.eq.s32.totalorder %s26, 1
    %p217 = por %p215, %p216
    %p219 = scmp.ne.s32.totalorder %s204, %s218
    %p220 = scmp.eq.s32.totalorder %s26, 0
    %p221 = por %p219, %p220
    %s223 = sadd.s32 %s222, 1
    %p226 = scmp.eq.s32.totalorder %s20, 1
    %p227 = scmp.ne.s32.totalorder %s222, %s224
    %p228 = scmp.eq.s32.totalorder %s20, 0
    %p229 = por %p227, %p228
    %p230 = scmp.ne.s32.totalorder %s222, %s224
    %p231 = scmp.eq.s32.totalorder %s25, 1
    %p232 = por %p230, %p231
    %p233 = scmp.ne.s32.totalorder %s224, %s225
    %p234 = scmp.eq.s32.totalorder %s25, 0
    %p235 = por %p233, %p234
    %p236 = scmp.ne.s32.totalorder %s224, %s225
    %p237 = scmp.eq.s32.totalorder %s26, 1
    %p238 = por %p236, %p237
    %p240 = scmp.ne.s32.totalorder %s225, %s239
    %p241 = scmp.eq.s32.totalorder %s26, 0
    %p242 = por %p240, %p241
    %s244 = sadd.s32 %s243, 1
    %p247 = scmp.eq.s32.totalorder %s20, 1
    %p248 = scmp.ne.s32.totalorder %s243, %s245
    %p249 = scmp.eq.s32.totalorder %s20, 0
    %p250 = por %p248, %p249
    %p251 = scmp.ne.s32.totalorder %s243, %s245
    %p252 = scmp.eq.s32.totalorder %s25, 1
    %p253 = por %p251, %p252
    %p254 = scmp.ne.s32.totalorder %s245, %s246
    %p255 = scmp.eq.s32.totalorder %s25, 0
    %p256 = por %p254, %p255
    %p257 = scmp.ne.s32.totalorder %s245, %s246
    %p258 = scmp.eq.s32.totalorder %s26, 1
    %p259 = por %p257, %p258
    %p261 = scmp.ne.s32.totalorder %s246, %s260
    %p262 = scmp.eq.s32.totalorder %s26, 0
    %p263 = por %p261, %p262
    %s265 = sadd.s32 %s264, 1
    %p268 = scmp.eq.s32.totalorder %s20, 1
    %p269 = scmp.ne.s32.totalorder %s264, %s266
    %p270 = scmp.eq.s32.totalorder %s20, 0
    %p271 = por %p269, %p270
    %p272 = scmp.ne.s32.totalorder %s264, %s266
    %p273 = scmp.eq.s32.totalorder %s25, 1
    %p274 = por %p272, %p273
    %p275 = scmp.ne.s32.totalorder %s266, %s267
    %p276 = scmp.eq.s32.totalorder %s25, 0
    %p277 = por %p275, %p276
    %p278 = scmp.ne.s32.totalorder %s266, %s267
    %p279 = scmp.eq.s32.totalorder %s26, 1
    %p280 = por %p278, %p279
    %p282 = scmp.ne.s32.totalorder %s267, %s281
    %p283 = scmp.eq.s32.totalorder %s26, 0
    %p284 = por %p282, %p283
    %s286 = sadd.s32 %s285, 1
    %p289 = scmp.eq.s32.totalorder %s20, 1
    %p290 = scmp.ne.s32.totalorder %s285, %s287
    %p291 = scmp.eq.s32.totalorder %s20, 0
    %p292 = por %p290, %p291
    %p293 = scmp.ne.s32.totalorder %s285, %s287
    %p294 = scmp.eq.s32.totalorder %s25, 1
    %p295 = por %p293, %p294
    %p296 = scmp.ne.s32.totalorder %s287, %s288
    %p297 = scmp.eq.s32.totalorder %s25, 0
    %p298 = por %p296, %p297
    %p299 = scmp.ne.s32.totalorder %s287, %s288
    %p300 = scmp.eq.s32.totalorder %s26, 1
    %p301 = por %p299, %p300
    %p303 = scmp.ne.s32.totalorder %s288, %s302
    %p304 = scmp.eq.s32.totalorder %s26, 0
    %p305 = por %p303, %p304
    %s307 = sadd.s32 %s306, 1
    %p310 = scmp.eq.s32.totalorder %s20, 1
    %p311 = scmp.ne.s32.totalorder %s306, %s308
    %p312 = scmp.eq.s32.totalorder %s20, 0
    %p313 = por %p311, %p312
    %p314 = scmp.ne.s32.totalorder %s306, %s308
    %p315 = scmp.eq.s32.totalorder %s25, 1
    %p316 = por %p314, %p315
    %p317 = scmp.ne.s32.totalorder %s308, %s309
    %p318 = scmp.eq.s32.totalorder %s25, 0
    %p319 = por %p317, %p318
    %p320 = scmp.ne.s32.totalorder %s308, %s309
    %p321 = scmp.eq.s32.totalorder %s26, 1
    %p322 = por %p320, %p321
    %p324 = scmp.ne.s32.totalorder %s309, %s323
    %p325 = scmp.eq.s32.totalorder %s26, 0
    %p326 = por %p324, %p325
    %s327 = ssub.s32 %s20, %s27
    %p328 = scmp.eq.s32.totalorder %s327, 0
    %s330 = sadd.s32 %s329, 1
    %s331 = scalar_select %p328, %s329, %s330
    %p334 = pneg %p328
    %p335 = scmp.eq.s32.totalorder %s20, 1
    %p336 = por %p334, %p335
    %p337 = scmp.ne.s32.totalorder %s329, %s332
    %p338 = scmp.eq.s32.totalorder %s20, 0
    %p339 = por %p337, %p338
    %p340 = scmp.ne.s32.totalorder %s329, %s332
    %p341 = scmp.eq.s32.totalorder %s25, 1
    %p342 = por %p340, %p341
    %p343 = scmp.ne.s32.totalorder %s332, %s333
    %p344 = scmp.eq.s32.totalorder %s25, 0
    %p345 = por %p343, %p344
    %p346 = scmp.ne.s32.totalorder %s332, %s333
    %p347 = scmp.eq.s32.totalorder %s26, 1
    %p348 = por %p346, %p347
    %p350 = scmp.ne.s32.totalorder %s333, %s349
    %p351 = scmp.eq.s32.totalorder %s26, 0
    %p352 = por %p350, %p351
    %p353 = scmp.le.s32.totalorder 1, %s20
    %p354 = scmp.lt.s32.totalorder %s20, 3
    %p355 = pnand %p353, %p354
    %p356 = pneg %p355
    // Predicated region
    $region9: #{conv_trans_block_forward.1} parent=5 // pred_check
      _
    $region10: #{conv_trans_block_forward.1} parent=5 // pred_check_branch
      %358 = sbr.rel (%p355) target = $region12
    $region11: #{conv_trans_block_forward.1} parent=5 // pred_region
      %s359 = ssub.s32 %s20, 1
      // Predicated region
      $region13: #{conv_trans_block_forward.1} parent=11 // pred_check
        %p360 = pneg %p67
      $region14: #{conv_trans_block_forward.1} parent=11 // pred_check_branch
        %362 = sbr.rel (%p360) target = $region16
      $region15: #{conv_trans_block_forward.1} parent=11 // pred_region
        _
      $region16: #{conv_trans_block_forward.1} parent=11 // pred_fallthru
        _
      // Predicated region
      $region17: #{conv_trans_block_forward.1} parent=11 // pred_check
        %p363 = pneg %p88
      $region18: #{conv_trans_block_forward.1} parent=11 // pred_check_branch
        %365 = sbr.rel (%p363) target = $region20
      $region19: #{conv_trans_block_forward.1} parent=11 // pred_region
        _
      $region20: #{conv_trans_block_forward.1} parent=11 // pred_fallthru
        _
      // Predicated region
      $region21: #{conv_trans_block_forward.1} parent=11 // pred_check
        %p366 = pneg %p109
      $region22: #{conv_trans_block_forward.1} parent=11 // pred_check_branch
        %368 = sbr.rel (%p366) target = $region24
      $region23: #{conv_trans_block_forward.1} parent=11 // pred_region
        _
      $region24: #{conv_trans_block_forward.1} parent=11 // pred_fallthru
        _
      // Predicated region
      $region25: #{conv_trans_block_forward.1} parent=11 // pred_check
        %p369 = pneg %p130
      $region26: #{conv_trans_block_forward.1} parent=11 // pred_check_branch
        %371 = sbr.rel (%p369) target = $region28
      $region27: #{conv_trans_block_forward.1} parent=11 // pred_region
        _
      $region28: #{conv_trans_block_forward.1} parent=11 // pred_fallthru
        _
      // Predicated region
      $region29: #{conv_trans_block_forward.1} parent=11 // pred_check
        %p372 = pneg %p151
      $region30: #{conv_trans_block_forward.1} parent=11 // pred_check_branch
        %374 = sbr.rel (%p372) target = $region32
      $region31: #{conv_trans_block_forward.1} parent=11 // pred_region
        _
      $region32: #{conv_trans_block_forward.1} parent=11 // pred_fallthru
        _
      // Predicated region
      $region33: #{conv_trans_block_forward.1} parent=11 // pred_check
        %p375 = pneg %p172
      $region34: #{conv_trans_block_forward.1} parent=11 // pred_check_branch
        %377 = sbr.rel (%p375) target = $region36
      $region35: #{conv_trans_block_forward.1} parent=11 // pred_region
        _
      $region36: #{conv_trans_block_forward.1} parent=11 // pred_fallthru
        _
      // Predicated region
      $region37: #{conv_trans_block_forward.1} parent=11 // pred_check
        %p378 = pneg %p193
      $region38: #{conv_trans_block_forward.1} parent=11 // pred_check_branch
        %380 = sbr.rel (%p378) target = $region40
      $region39: #{conv_trans_block_forward.1} parent=11 // pred_region
        _
      $region40: #{conv_trans_block_forward.1} parent=11 // pred_fallthru
        _
      // Predicated region
      $region41: #{conv_trans_block_forward.1} parent=11 // pred_check
        %p381 = pneg %p214
      $region42: #{conv_trans_block_forward.1} parent=11 // pred_check_branch
        %383 = sbr.rel (%p381) target = $region44
      $region43: #{conv_trans_block_forward.1} parent=11 // pred_region
        _
      $region44: #{conv_trans_block_forward.1} parent=11 // pred_fallthru
        _
      // Predicated region
      $region45: #{conv_trans_block_forward.1} parent=11 // pred_check
        %p384 = pneg %p235
      $region46: #{conv_trans_block_forward.1} parent=11 // pred_check_branch
        %386 = sbr.rel (%p384) target = $region48
      $region47: #{conv_trans_block_forward.1} parent=11 // pred_region
        _
      $region48: #{conv_trans_block_forward.1} parent=11 // pred_fallthru
        _
      // Predicated region
      $region49: #{conv_trans_block_forward.1} parent=11 // pred_check
        %p387 = pneg %p256
      $region50: #{conv_trans_block_forward.1} parent=11 // pred_check_branch
        %389 = sbr.rel (%p387) target = $region52
      $region51: #{conv_trans_block_forward.1} parent=11 // pred_region
        _
      $region52: #{conv_trans_block_forward.1} parent=11 // pred_fallthru
        _
      // Predicated region
      $region53: #{conv_trans_block_forward.1} parent=11 // pred_check
        %p390 = pneg %p277
      $region54: #{conv_trans_block_forward.1} parent=11 // pred_check_branch
        %392 = sbr.rel (%p390) target = $region56
      $region55: #{conv_trans_block_forward.1} parent=11 // pred_region
        _
      $region56: #{conv_trans_block_forward.1} parent=11 // pred_fallthru
        _
      // Predicated region
      $region57: #{conv_trans_block_forward.1} parent=11 // pred_check
        %p393 = pneg %p298
      $region58: #{conv_trans_block_forward.1} parent=11 // pred_check_branch
        %395 = sbr.rel (%p393) target = $region60
      $region59: #{conv_trans_block_forward.1} parent=11 // pred_region
        _
      $region60: #{conv_trans_block_forward.1} parent=11 // pred_fallthru
        _
      // Predicated region
      $region61: #{conv_trans_block_forward.1} parent=11 // pred_check
        %p396 = pneg %p319
      $region62: #{conv_trans_block_forward.1} parent=11 // pred_check_branch
        %398 = sbr.rel (%p396) target = $region64
      $region63: #{conv_trans_block_forward.1} parent=11 // pred_region
        _
      $region64: #{conv_trans_block_forward.1} parent=11 // pred_fallthru
        _
    $region12: #{conv_trans_block_forward.1} parent=5 // pred_fallthru
      _
    %p399 = scmp.lt.s32.totalorder %s20, 2
    // Predicated region
    $region65: #{conv_trans_block_forward.1} parent=5 // pred_check
      %p400 = pneg %p399
    $region66: #{conv_trans_block_forward.1} parent=5 // pred_check_branch
      %402 = sbr.rel (%p400) target = $region68
    $region67: #{conv_trans_block_forward.1} parent=5 // pred_region
      // Predicated region
      $region69: #{conv_trans_block_forward.1} parent=67 // pred_check
        %p403 = pneg %p40
      $region70: #{conv_trans_block_forward.1} parent=67 // pred_check_branch
        %405 = sbr.rel (%p403) target = $region72
      $region71: #{conv_trans_block_forward.1} parent=67 // pred_region
        %p406 = scmp.lt.s32.totalorder %s20, 1
        %s407 = scalar_select %p406, %s20, 1
        %s408 = smul.addr %s407, 2
        %s409 = smul.addr %s408, 4
        %s410 = scalar_lea.vmem %s0, %s409
      $region72: #{conv_trans_block_forward.1} parent=67 // pred_fallthru
        _
    $region68: #{conv_trans_block_forward.1} parent=5 // pred_fallthru
      _
    %p411 = scmp.le.s32.totalorder 1, %s20
    %p412 = scmp.lt.s32.totalorder %s20, 3
    %p413 = pnand %p411, %p412
    %p414 = pneg %p413
    // Predicated region
    $region73: #{conv_trans_block_forward.1} parent=5 // pred_check
      _
    $region74: #{conv_trans_block_forward.1} parent=5 // pred_check_branch
      %416 = sbr.rel (%p413) target = $region76
    $region75: #{conv_trans_block_forward.1} parent=5 // pred_region
      %s417 = ssub.s32 %s20, 1
      %p418 = scmp.lt.s32.totalorder %s25, 1
      %s419 = scalar_select %p418, %s25, 1
      %s420 = smul.addr %s419, 2
      %s421 = smul.addr %s420, 4
      %s422 = scalar_lea.vmem %s0, %s421
      %p423 = pneg %p46
      %p424 = pneg %p43
      %p425 = pneg %p67
      %p426 = pneg %p64
      %p427 = pneg %p88
      %p428 = pneg %p85
      %p429 = pneg %p109
      %p430 = pneg %p106
      %p431 = pneg %p130
      %p432 = pneg %p127
      %p433 = pneg %p151
      %p434 = pneg %p148
      %p435 = pneg %p172
      %p436 = pneg %p169
      %p437 = pneg %p193
      %p438 = pneg %p190
      %p439 = pneg %p214
      %p440 = pneg %p211
      %p441 = pneg %p235
      %p442 = pneg %p232
      %p443 = pneg %p256
      %p444 = pneg %p253
      %p445 = pneg %p277
      %p446 = pneg %p274
      %p447 = pneg %p298
      %p448 = pneg %p295
      %p449 = pneg %p319
      %p450 = pneg %p316
      %p451 = pneg %p345
      %p452 = pneg %p342
      %p453 = scmp.lt.s32.totalorder %s25, 1
      %s454 = scalar_select %p453, %s25, 1
      %s455 = smul.addr %s454, 4
      %s456 = smul.addr %s455, 8
      %s457 = scalar_lea.vmem %s14, %s456
      %p458 = scmp.lt.s32.totalorder %s25, 1
      %s459 = scalar_select %p458, %s25, 1
      %s460 = smul.addr %s459, 2
      %s461 = smul.addr %s460, 4
      %s462 = scalar_lea.vmem %s0, %s461
      %p463 = scmp.lt.s32.totalorder %s25, 1
      %s464 = scalar_select %p463, %s25, 1
      %s465 = smul.addr %s464, 4
      %s466 = smul.addr %s465, 8
      %s467 = scalar_lea.vmem %s14, %s466
      %v468 = vld [vmem:[%s462] sm:$0xff]
      %v469 = vld [vmem:[%s1] sm:$0xff]
      %v470 = vld [vmem:[%s1 + $0x8] sm:$0xff]
      %v471 = vld [vmem:[%s1 + $0x10] sm:$0xff]
      %v472 = vld [vmem:[%s1 + $0x18] sm:$0xff]
      %v473 = vld [vmem:[%s1 + $0x20] sm:$0xff]
      %v474 = vld [vmem:[%s1 + $0x28] sm:$0xff]
      %v475 = vld [vmem:[%s1 + $0x30] sm:$0xff]
      %v476 = vld [vmem:[%s1 + $0x38] sm:$0xff]
      %v477 = vld [vmem:[%s1 + $0x40] sm:$0xf]
      %v478 = vld [vmem:[%s1 + $0x48] sm:$0xf]
      %v479 = vld [vmem:[%s2] sm:$0xff]
      %v480 = vld [vmem:[%s2 + $0x8] sm:$0xff]
      %v481 = vld [vmem:[%s2 + $0x10] sm:$0xf]
      %v482 = vld [vmem:[%s3] sm:$0xff]
      %v483 = vld [vmem:[%s3 + $0x8] sm:$0xff]
      %v484 = vld [vmem:[%s3 + $0x10] sm:$0xf]
      %486 = vset.pattern.permute.xlu0 0
      %487 = vperm.xlu0 %486, %v482
      %v488 = vpop.permute.xlu0 %487
      %491 = vset.pattern.permute.xlu0 0
      %492 = vperm.xlu0 %491, %v483
      %v493 = vpop.permute.xlu0 %492
      %496 = vset.pattern.permute.xlu0 0
      %497 = vperm.xlu0 %496, %v484
      %v498 = vpop.permute.xlu0 %497
      %v501 = vcombine.high %v468, %v468
      %vm502 = vcmask 31744
      %v504 = vsel %vm502, %v479, 0
      %v507 = vsel %vm502, %v480, 0
      %v510 = vsel %vm502, %v481, 0
      %vm512 = vcmask 1043456
      %v513 = vsel %vm512, %v468, 0
      %v515 = vsel %vm512, %v501, 0
      %517 = vmatprep.subr.mxu0 %v515
      %518 = vmatpush1.msra.mxu0 %v513
      %519 = vmatprep.subr.mxu0 0.0
      %520 = vmatpush1.msra.mxu0 0.0
      %521 = vmatprep.subr.mxu0 0.0
      %522 = vmatpush1.msra.mxu0 0.0
      %523 = vmatprep.subr.mxu0 0.0
      %524 = vmatpush1.msra.mxu0 0.0
      %525 = vmatprep.subr.mxu0 0.0
      %526 = vmatpush1.msra.mxu0 0.0
      %527 = vmatprep.subr.mxu0 0.0
      %528 = vmatpush1.msra.mxu0 0.0
      %529 = vmatprep.subr.mxu0 0.0
      %530 = vmatpush1.msra.mxu0 0.0
      %531 = vmatprep.subr.mxu0 0.0
      %532 = vmatpush1.msra.mxu0 0.0
      %533 = vmatprep.subr.mxu0 0.0
      %534 = vmatpush1.msra.mxu0 0.0
      %535 = vmatprep.subr.mxu0 0.0
      %536 = vmatpush1.msra.mxu0 0.0
      %537 = vmatprep.subr.mxu0 0.0
      %538 = vmatpush1.msra.mxu0 0.0
      %539 = vmatprep.subr.mxu0 0.0
      %540 = vmatpush1.msra.mxu0 0.0
      %541 = vmatprep.subr.mxu0 0.0
      %542 = vmatpush1.msra.mxu0 0.0
      %543 = vmatprep.subr.mxu0 0.0
      %544 = vmatpush1.msra.mxu0 0.0
      %545 = vmatprep.subr.mxu0 0.0
      %546 = vmatpush1.msra.mxu0 0.0
      %547 = vmatprep.subr.mxu0 0.0
      %548 = vmatpush1.msra.mxu0 0.0
      %549 = vmatprep.subr.mxu0 0.0
      %550 = vmatpush1.msra.mxu0 0.0
      %551 = vmatprep.subr.mxu0 0.0
      %552 = vmatpush1.msra.mxu0 0.0
      %553 = vmatprep.subr.mxu0 0.0
      %554 = vmatpush1.msra.mxu0 0.0
      %555 = vmatprep.subr.mxu0 0.0
      %556 = vmatpush1.msra.mxu0 0.0
      %557 = vmatprep.subr.mxu0 0.0
      %558 = vmatpush1.msra.mxu0 0.0
      %559 = vmatprep.subr.mxu0 0.0
      %560 = vmatpush1.msra.mxu0 0.0
      %561 = vmatprep.subr.mxu0 0.0
      %562 = vmatpush1.msra.mxu0 0.0
      %563 = vmatprep.subr.mxu0 0.0
      %564 = vmatpush1.msra.mxu0 0.0
      %565 = vmatprep.subr.mxu0 0.0
      %566 = vmatpush1.msra.mxu0 0.0
      %567 = vmatprep.subr.mxu0 0.0
      %568 = vmatpush1.msra.mxu0 0.0
      %569 = vmatprep.subr.mxu0 0.0
      %570 = vmatpush1.msra.mxu0 0.0
      %571 = vmatprep.subr.mxu0 0.0
      %572 = vmatpush1.msra.mxu0 0.0
      %573 = vmatprep.subr.mxu0 0.0
      %574 = vmatpush1.msra.mxu0 0.0
      %575 = vmatprep.subr.mxu0 0.0
      %576 = vmatpush1.msra.mxu0 0.0
      %577 = vmatprep.subr.mxu0 0.0
      %578 = vmatpush1.msra.mxu0 0.0
      %579 = vmatprep.subr.mxu0 0.0
      %580 = vmatpush1.msra.mxu0 0.0
      %581 = vmatprep.mubr.f32.mxu0 0.0
      %582 = vmatmul.mubr.f32.gmra.mrb[0].mxu0 %v504
      %v583 = vpop.f32.mrb[0].mxu0
      %v584 = vadd.f32 %v488, %v583
      %v585 = vpop.f32.mrb[0].mxu0
      %v586 = vadd.f32 %v488, %v585
      %587 = vmatprep.mubr.f32.mxu0 0.0
      %588 = vmatmul.mubr.f32.gmra.mrb[0].mxu0 %v507
      %v589 = vpop.f32.mrb[0].mxu0
      %v590 = vadd.f32 %v493, %v589
      %v591 = vpop.f32.mrb[0].mxu0
      %v592 = vadd.f32 %v493, %v591
      %593 = vmatprep.mubr.f32.mxu0 0.0
      %594 = vmatmul.mubr.f32.gmra.mrb[0].mxu0 %v510
      %v595 = vpop.f32.mrb[0].mxu0
      %v596 = vadd.f32 %v498, %v595
      %v597 = vpop.f32.mrb[0].mxu0
      %v598 = vadd.f32 %v498, %v597
      %599 = vdwg.mxu0
      %vm600 = vcmp.ge.f32.partialorder %v596, 0.0
      %vm601 = vcmp.ge.f32.partialorder %v598, 0.0
      %v602 = vmul.f32 %v596, 0.01
      %v603 = vmul.f32 %v598, 0.01
      %v604 = vsel %vm600, %v596, %v602
      %v605 = vsel %vm601, %v598, %v603
      %606 = vrot.lane.b32.xlu0 %v604, 17
      %v607 = vpop.permute.xlu0 %606
      %608 = vrot.lane.b32.xlu0 %v605, 17
      %v609 = vpop.permute.xlu0 %608
      %v610 = vlaneseq
      %v611 = vand.u32 %v610, 127
      %vm612 = vcmp.lt.s32.totalorder %v611, 17
      %v613 = vsel %vm612, %v607, %v609
      %v614 = vsel %vm612, %v609, %v607
      %615 = vrot.lane.b32.xlu0 %v604, 16
      %v616 = vpop.permute.xlu0 %615
      %617 = vrot.lane.b32.xlu0 %v605, 16
      %v618 = vpop.permute.xlu0 %617
      %vm619 = vcmp.lt.s32.totalorder %v611, 16
      %v620 = vsel %vm619, %v616, %v618
      %v621 = vsel %vm619, %v618, %v616
      %622 = vrot.lane.b32.xlu0 %v604, 15
      %v623 = vpop.permute.xlu0 %622
      %624 = vrot.lane.b32.xlu0 %v605, 15
      %v625 = vpop.permute.xlu0 %624
      %vm626 = vcmp.lt.s32.totalorder %v611, 15
      %v627 = vsel %vm626, %v623, %v625
      %v628 = vsel %vm626, %v625, %v623
      %629 = vrot.lane.b32.xlu0 %v604, 1
      %v630 = vpop.permute.xlu0 %629
      %631 = vrot.lane.b32.xlu0 %v605, 1
      %v632 = vpop.permute.xlu0 %631
      %vm633 = vcmp.lt.s32.totalorder %v611, 1
      %v634 = vsel %vm633, %v630, %v632
      %v635 = vsel %vm633, %v632, %v630
      %636 = vrot.lane.b32.xlu0 %v604, 127
      %v637 = vpop.permute.xlu0 %636
      %638 = vrot.lane.b32.xlu0 %v605, 127
      %v639 = vpop.permute.xlu0 %638
      %vm640 = vcmp.lt.s32.totalorder %v611, 127
      %v641 = vsel %vm640, %v637, %v639
      %v642 = vsel %vm640, %v639, %v637
      %643 = vrot.lane.b32.xlu0 %v604, 113
      %v644 = vpop.permute.xlu0 %643
      %645 = vrot.lane.b32.xlu0 %v605, 113
      %v646 = vpop.permute.xlu0 %645
      %vm647 = vcmp.lt.s32.totalorder %v611, 113
      %v648 = vsel %vm647, %v644, %v646
      %v649 = vsel %vm647, %v646, %v644
      %650 = vrot.lane.b32.xlu0 %v604, 112
      %v651 = vpop.permute.xlu0 %650
      %652 = vrot.lane.b32.xlu0 %v605, 112
      %v653 = vpop.permute.xlu0 %652
      %vm654 = vcmp.lt.s32.totalorder %v611, 112
      %v655 = vsel %vm654, %v651, %v653
      %v656 = vsel %vm654, %v653, %v651
      %657 = vrot.lane.b32.xlu0 %v604, 111
      %v658 = vpop.permute.xlu0 %657
      %659 = vrot.lane.b32.xlu0 %v605, 111
      %v660 = vpop.permute.xlu0 %659
      %vm661 = vcmp.lt.s32.totalorder %v611, 111
      %v662 = vsel %vm661, %v658, %v660
      %v663 = vsel %vm661, %v660, %v658
      %v666 = vrot.slane %v621, 4
      %v667 = vrot.slane %v620, 4
      %v672 = vrot.slane %v635, 4
      %v673 = vrot.slane %v634, 4
      %v678 = vrot.slane %v641, 4
      %v679 = vrot.slane %v642, 4
      %v684 = vrot.slane %v655, 4
      %v685 = vrot.slane %v656, 4
      %v688 = vsel %vm512, %v614, %v666
      %v689 = vsel %vm512, %v613, %v667
      %v690 = vsel %vm512, %v628, %v672
      %v691 = vsel %vm512, %v627, %v673
      %v692 = vsel %vm512, %v604, %v678
      %v693 = vsel %vm512, %v605, %v679
      %v694 = vsel %vm512, %v648, %v684
      %v695 = vsel %vm512, %v649, %v685
      %v696 = vmul.f32 %v688, %v469
      %v697 = vmul.f32 %v689, %v470
      %v698 = vmul.f32 %v690, %v471
      %v699 = vmul.f32 %v691, %v472
      %v700 = vmul.f32 %v692, %v473
      %v701 = vmul.f32 %v693, %v474
      %v702 = vmul.f32 %v694, %v475
      %v703 = vmul.f32 %v695, %v476
      %v704 = vmul.f32 %v662, %v477
      %v705 = vmul.f32 %v663, %v478
      %v706 = vld [vmem:[%s4] sm:$0xf]
      %v707 = vld [vmem:[%s5] sm:$0xf]
      %709 = vset.pattern.permute.xlu0 0
      %710 = vperm.xlu0 %709, %v707
      %v711 = vpop.permute.xlu0 %710
      %vm713 = vcmask 293888
      %v715 = vsel %vm713, %v706, 0
      %v718 = vsel %vm512, %v704, 0
      %v721 = vsel %vm512, %v705, 0
      %723 = vmatprep.subr.mxu0 %v697
      %724 = vmatpush1.msra.mxu0 %v696
      %725 = vmatprep.subr.mxu0 %v699
      %726 = vmatpush1.msra.mxu0 %v698
      %727 = vmatprep.subr.mxu0 %v701
      %728 = vmatpush1.msra.mxu0 %v700
      %729 = vmatprep.subr.mxu0 %v703
      %730 = vmatpush1.msra.mxu0 %v702
      %731 = vmatprep.subr.mxu0 %v721
      %732 = vmatpush1.msra.mxu0 %v718
      %733 = vmatprep.subr.mxu0 0.0
      %734 = vmatpush1.msra.mxu0 0.0
      %735 = vmatprep.subr.mxu0 0.0
      %736 = vmatpush1.msra.mxu0 0.0
      %737 = vmatprep.subr.mxu0 0.0
      %738 = vmatpush1.msra.mxu0 0.0
      %739 = vmatprep.subr.mxu0 0.0
      %740 = vmatpush1.msra.mxu0 0.0
      %741 = vmatprep.subr.mxu0 0.0
      %742 = vmatpush1.msra.mxu0 0.0
      %743 = vmatprep.subr.mxu0 0.0
      %744 = vmatpush1.msra.mxu0 0.0
      %745 = vmatprep.subr.mxu0 0.0
      %746 = vmatpush1.msra.mxu0 0.0
      %747 = vmatprep.subr.mxu0 0.0
      %748 = vmatpush1.msra.mxu0 0.0
      %749 = vmatprep.subr.mxu0 0.0
      %750 = vmatpush1.msra.mxu0 0.0
      %751 = vmatprep.subr.mxu0 0.0
      %752 = vmatpush1.msra.mxu0 0.0
      %753 = vmatprep.subr.mxu0 0.0
      %754 = vmatpush1.msra.mxu0 0.0
      %755 = vmatprep.subr.mxu0 0.0
      %756 = vmatpush1.msra.mxu0 0.0
      %757 = vmatprep.subr.mxu0 0.0
      %758 = vmatpush1.msra.mxu0 0.0
      %759 = vmatprep.subr.mxu0 0.0
      %760 = vmatpush1.msra.mxu0 0.0
      %761 = vmatprep.subr.mxu0 0.0
      %762 = vmatpush1.msra.mxu0 0.0
      %763 = vmatprep.subr.mxu0 0.0
      %764 = vmatpush1.msra.mxu0 0.0
      %765 = vmatprep.subr.mxu0 0.0
      %766 = vmatpush1.msra.mxu0 0.0
      %767 = vmatprep.subr.mxu0 0.0
      %768 = vmatpush1.msra.mxu0 0.0
      %769 = vmatprep.subr.mxu0 0.0
      %770 = vmatpush1.msra.mxu0 0.0
      %771 = vmatprep.subr.mxu0 0.0
      %772 = vmatpush1.msra.mxu0 0.0
      %773 = vmatprep.subr.mxu0 0.0
      %774 = vmatpush1.msra.mxu0 0.0
      %775 = vmatprep.subr.mxu0 0.0
      %776 = vmatpush1.msra.mxu0 0.0
      %777 = vmatprep.subr.mxu0 0.0
      %778 = vmatpush1.msra.mxu0 0.0
      %779 = vmatprep.subr.mxu0 0.0
      %780 = vmatpush1.msra.mxu0 0.0
      %781 = vmatprep.subr.mxu0 0.0
      %782 = vmatpush1.msra.mxu0 0.0
      %783 = vmatprep.subr.mxu0 0.0
      %784 = vmatpush1.msra.mxu0 0.0
      %785 = vmatprep.subr.mxu0 0.0
      %786 = vmatpush1.msra.mxu0 0.0
      %787 = vmatprep.mubr.f32.mxu0 0.0
      %788 = vmatmul.mubr.f32.gmra.mrb[0].mxu0 %v715
      %v789 = vpop.f32.mrb[0].mxu0
      %v790 = vadd.f32 %v711, %v789
      %v791 = vpop.f32.mrb[0].mxu0
      %v792 = vadd.f32 %v711, %v791
      %793 = vdwg.mxu0
      %vm794 = vcmp.ge.f32.partialorder %v790, 0.0
      %vm795 = vcmp.ge.f32.partialorder %v792, 0.0
      %v796 = vmul.f32 %v790, 0.01
      %v797 = vmul.f32 %v792, 0.01
      %v798 = vsel %vm794, %v790, %v796
      %v799 = vsel %vm795, %v792, %v797
      %v800 = vld [vmem:[%s6] sm:$0xff]
      %v801 = vld [vmem:[%s6 + $0x8] sm:$0xff]
      %v802 = vld [vmem:[%s7] sm:$0xff]
      %v803 = vld [vmem:[%s7 + $0x8] sm:$0xff]
      %805 = vset.pattern.permute.xlu0 0
      %806 = vperm.xlu0 %805, %v802
      %v807 = vpop.permute.xlu0 %806
      %810 = vset.pattern.permute.xlu0 0
      %811 = vperm.xlu0 %810, %v803
      %v812 = vpop.permute.xlu0 %811
      %v815 = vsel %vm502, %v800, 0
      %v818 = vsel %vm502, %v801, 0
      %v821 = vsel %vm512, %v798, 0
      %v824 = vsel %vm512, %v799, 0
      %826 = vmatprep.subr.mxu0 %v824
      %827 = vmatpush1.msra.mxu0 %v821
      %828 = vmatprep.subr.mxu0 0.0
      %829 = vmatpush1.msra.mxu0 0.0
      %830 = vmatprep.subr.mxu0 0.0
      %831 = vmatpush1.msra.mxu0 0.0
      %832 = vmatprep.subr.mxu0 0.0
      %833 = vmatpush1.msra.mxu0 0.0
      %834 = vmatprep.subr.mxu0 0.0
      %835 = vmatpush1.msra.mxu0 0.0
      %836 = vmatprep.subr.mxu0 0.0
      %837 = vmatpush1.msra.mxu0 0.0
      %838 = vmatprep.subr.mxu0 0.0
      %839 = vmatpush1.msra.mxu0 0.0
      %840 = vmatprep.subr.mxu0 0.0
      %841 = vmatpush1.msra.mxu0 0.0
      %842 = vmatprep.subr.mxu0 0.0
      %843 = vmatpush1.msra.mxu0 0.0
      %844 = vmatprep.subr.mxu0 0.0
      %845 = vmatpush1.msra.mxu0 0.0
      %846 = vmatprep.subr.mxu0 0.0
      %847 = vmatpush1.msra.mxu0 0.0
      %848 = vmatprep.subr.mxu0 0.0
      %849 = vmatpush1.msra.mxu0 0.0
      %850 = vmatprep.subr.mxu0 0.0
      %851 = vmatpush1.msra.mxu0 0.0
      %852 = vmatprep.subr.mxu0 0.0
      %853 = vmatpush1.msra.mxu0 0.0
      %854 = vmatprep.subr.mxu0 0.0
      %855 = vmatpush1.msra.mxu0 0.0
      %856 = vmatprep.subr.mxu0 0.0
      %857 = vmatpush1.msra.mxu0 0.0
      %858 = vmatprep.subr.mxu0 0.0
      %859 = vmatpush1.msra.mxu0 0.0
      %860 = vmatprep.subr.mxu0 0.0
      %861 = vmatpush1.msra.mxu0 0.0
      %862 = vmatprep.subr.mxu0 0.0
      %863 = vmatpush1.msra.mxu0 0.0
      %864 = vmatprep.subr.mxu0 0.0
      %865 = vmatpush1.msra.mxu0 0.0
      %866 = vmatprep.subr.mxu0 0.0
      %867 = vmatpush1.msra.mxu0 0.0
      %868 = vmatprep.subr.mxu0 0.0
      %869 = vmatpush1.msra.mxu0 0.0
      %870 = vmatprep.subr.mxu0 0.0
      %871 = vmatpush1.msra.mxu0 0.0
      %872 = vmatprep.subr.mxu0 0.0
      %873 = vmatpush1.msra.mxu0 0.0
      %874 = vmatprep.subr.mxu0 0.0
      %875 = vmatpush1.msra.mxu0 0.0
      %876 = vmatprep.subr.mxu0 0.0
      %877 = vmatpush1.msra.mxu0 0.0
      %878 = vmatprep.subr.mxu0 0.0
      %879 = vmatpush1.msra.mxu0 0.0
      %880 = vmatprep.subr.mxu0 0.0
      %881 = vmatpush1.msra.mxu0 0.0
      %882 = vmatprep.subr.mxu0 0.0
      %883 = vmatpush1.msra.mxu0 0.0
      %884 = vmatprep.subr.mxu0 0.0
      %885 = vmatpush1.msra.mxu0 0.0
      %886 = vmatprep.subr.mxu0 0.0
      %887 = vmatpush1.msra.mxu0 0.0
      %888 = vmatprep.subr.mxu0 0.0
      %889 = vmatpush1.msra.mxu0 0.0
      %890 = vmatprep.mubr.f32.mxu0 0.0
      %891 = vmatmul.mubr.f32.gmra.mrb[0].mxu0 %v815
      %v892 = vpop.f32.mrb[0].mxu0
      %v893 = vadd.f32 %v807, %v892
      %v894 = vpop.f32.mrb[0].mxu0
      %v895 = vadd.f32 %v807, %v894
      %896 = vmatprep.mubr.f32.mxu0 0.0
      %897 = vmatmul.mubr.f32.gmra.mrb[0].mxu0 %v818
      %v898 = vpop.f32.mrb[0].mxu0
      %v899 = vadd.f32 %v812, %v898
      %v900 = vpop.f32.mrb[0].mxu0
      %v901 = vadd.f32 %v812, %v900
      %902 = vdwg.mxu0
      %v903 = vadd.f32 %v893, %v584
      %v904 = vadd.f32 %v895, %v586
      %v905 = vadd.f32 %v899, %v590
      %v906 = vadd.f32 %v901, %v592
      %vm907 = vcmp.ge.f32.partialorder %v903, 0.0
      %vm908 = vcmp.ge.f32.partialorder %v904, 0.0
      %vm909 = vcmp.ge.f32.partialorder %v905, 0.0
      %vm910 = vcmp.ge.f32.partialorder %v906, 0.0
      %v911 = vmul.f32 %v903, 0.01
      %v912 = vmul.f32 %v904, 0.01
      %v913 = vmul.f32 %v905, 0.01
      %v914 = vmul.f32 %v906, 0.01
      %v915 = vsel %vm907, %v903, %v911
      %v916 = vsel %vm908, %v904, %v912
      %v917 = vsel %vm909, %v905, %v913
      %v918 = vsel %vm910, %v906, %v914
      %v919 = vld [vmem:[%s8] sm:$0xf]
      %v920 = vld [vmem:[%s9] sm:$0xf]
      %922 = vset.pattern.permute.xlu0 0
      %923 = vperm.xlu0 %922, %v920
      %v924 = vpop.permute.xlu0 %923
      %vm926 = vcmask 130048
      %v928 = vsel %vm926, %v919, 0
      %930 = vmatprep.subr.mxu0 %v916
      %931 = vmatpush1.msra.mxu0 %v915
      %932 = vmatprep.subr.mxu0 %v918
      %933 = vmatpush1.msra.mxu0 %v917
      %934 = vmatprep.subr.mxu0 0.0
      %935 = vmatpush1.msra.mxu0 0.0
      %936 = vmatprep.subr.mxu0 0.0
      %937 = vmatpush1.msra.mxu0 0.0
      %938 = vmatprep.subr.mxu0 0.0
      %939 = vmatpush1.msra.mxu0 0.0
      %940 = vmatprep.subr.mxu0 0.0
      %941 = vmatpush1.msra.mxu0 0.0
      %942 = vmatprep.subr.mxu0 0.0
      %943 = vmatpush1.msra.mxu0 0.0
      %944 = vmatprep.subr.mxu0 0.0
      %945 = vmatpush1.msra.mxu0 0.0
      %946 = vmatprep.subr.mxu0 0.0
      %947 = vmatpush1.msra.mxu0 0.0
      %948 = vmatprep.subr.mxu0 0.0
      %949 = vmatpush1.msra.mxu0 0.0
      %950 = vmatprep.subr.mxu0 0.0
      %951 = vmatpush1.msra.mxu0 0.0
      %952 = vmatprep.subr.mxu0 0.0
      %953 = vmatpush1.msra.mxu0 0.0
      %954 = vmatprep.subr.mxu0 0.0
      %955 = vmatpush1.msra.mxu0 0.0
      %956 = vmatprep.subr.mxu0 0.0
      %957 = vmatpush1.msra.mxu0 0.0
      %958 = vmatprep.subr.mxu0 0.0
      %959 = vmatpush1.msra.mxu0 0.0
      %960 = vmatprep.subr.mxu0 0.0
      %961 = vmatpush1.msra.mxu0 0.0
      %962 = vmatprep.subr.mxu0 0.0
      %963 = vmatpush1.msra.mxu0 0.0
      %964 = vmatprep.subr.mxu0 0.0
      %965 = vmatpush1.msra.mxu0 0.0
      %966 = vmatprep.subr.mxu0 0.0
      %967 = vmatpush1.msra.mxu0 0.0
      %968 = vmatprep.subr.mxu0 0.0
      %969 = vmatpush1.msra.mxu0 0.0
      %970 = vmatprep.subr.mxu0 0.0
      %971 = vmatpush1.msra.mxu0 0.0
      %972 = vmatprep.subr.mxu0 0.0
      %973 = vmatpush1.msra.mxu0 0.0
      %974 = vmatprep.subr.mxu0 0.0
      %975 = vmatpush1.msra.mxu0 0.0
      %976 = vmatprep.subr.mxu0 0.0
      %977 = vmatpush1.msra.mxu0 0.0
      %978 = vmatprep.subr.mxu0 0.0
      %979 = vmatpush1.msra.mxu0 0.0
      %980 = vmatprep.subr.mxu0 0.0
      %981 = vmatpush1.msra.mxu0 0.0
      %982 = vmatprep.subr.mxu0 0.0
      %983 = vmatpush1.msra.mxu0 0.0
      %984 = vmatprep.subr.mxu0 0.0
      %985 = vmatpush1.msra.mxu0 0.0
      %986 = vmatprep.subr.mxu0 0.0
      %987 = vmatpush1.msra.mxu0 0.0
      %988 = vmatprep.subr.mxu0 0.0
      %989 = vmatpush1.msra.mxu0 0.0
      %990 = vmatprep.subr.mxu0 0.0
      %991 = vmatpush1.msra.mxu0 0.0
      %992 = vmatprep.subr.mxu0 0.0
      %993 = vmatpush1.msra.mxu0 0.0
      %994 = vmatprep.mubr.f32.mxu0 0.0
      %995 = vmatmul.mubr.f32.gmra.mrb[0].mxu0 %v928
      %v996 = vpop.f32.mrb[0].mxu0
      %v997 = vadd.f32 %v924, %v996
      %v998 = vpop.f32.mrb[0].mxu0
      %v999 = vadd.f32 %v924, %v998
      %1000 = vdwg.mxu0
      %vm1001 = vcmp.ge.f32.partialorder %v997, 0.0
      %vm1002 = vcmp.ge.f32.partialorder %v999, 0.0
      %v1003 = vmul.f32 %v997, 0.01
      %v1004 = vmul.f32 %v999, 0.01
      %v1005 = vsel %vm1001, %v997, %v1003
      %v1006 = vsel %vm1002, %v999, %v1004
      %1007 = vrot.lane.b32.xlu0 %v1005, 17
      %v1008 = vpop.permute.xlu0 %1007
      %1009 = vrot.lane.b32.xlu0 %v1006, 17
      %v1010 = vpop.permute.xlu0 %1009
      %v1011 = vsel %vm612, %v1008, %v1010
      %v1012 = vsel %vm612, %v1010, %v1008
      %1013 = vrot.lane.b32.xlu0 %v1005, 16
      %v1014 = vpop.permute.xlu0 %1013
      %1015 = vrot.lane.b32.xlu0 %v1006, 16
      %v1016 = vpop.permute.xlu0 %1015
      %v1017 = vsel %vm619, %v1014, %v1016
      %v1018 = vsel %vm619, %v1016, %v1014
      %1019 = vrot.lane.b32.xlu0 %v1005, 15
      %v1020 = vpop.permute.xlu0 %1019
      %1021 = vrot.lane.b32.xlu0 %v1006, 15
      %v1022 = vpop.permute.xlu0 %1021
      %v1023 = vsel %vm626, %v1020, %v1022
      %v1024 = vsel %vm626, %v1022, %v1020
      %1025 = vrot.lane.b32.xlu0 %v1005, 1
      %v1026 = vpop.permute.xlu0 %1025
      %1027 = vrot.lane.b32.xlu0 %v1006, 1
      %v1028 = vpop.permute.xlu0 %1027
      %v1029 = vsel %vm633, %v1026, %v1028
      %v1030 = vsel %vm633, %v1028, %v1026
      %1031 = vrot.lane.b32.xlu0 %v1005, 127
      %v1032 = vpop.permute.xlu0 %1031
      %1033 = vrot.lane.b32.xlu0 %v1006, 127
      %v1034 = vpop.permute.xlu0 %1033
      %v1035 = vsel %vm640, %v1032, %v1034
      %v1036 = vsel %vm640, %v1034, %v1032
      %1037 = vrot.lane.b32.xlu0 %v1005, 113
      %v1038 = vpop.permute.xlu0 %1037
      %1039 = vrot.lane.b32.xlu0 %v1006, 113
      %v1040 = vpop.permute.xlu0 %1039
      %v1041 = vsel %vm647, %v1038, %v1040
      %v1042 = vsel %vm647, %v1040, %v1038
      %1043 = vrot.lane.b32.xlu0 %v1005, 112
      %v1044 = vpop.permute.xlu0 %1043
      %1045 = vrot.lane.b32.xlu0 %v1006, 112
      %v1046 = vpop.permute.xlu0 %1045
      %v1047 = vsel %vm654, %v1044, %v1046
      %v1048 = vsel %vm654, %v1046, %v1044
      %1049 = vrot.lane.b32.xlu0 %v1005, 111
      %v1050 = vpop.permute.xlu0 %1049
      %1051 = vrot.lane.b32.xlu0 %v1006, 111
      %v1052 = vpop.permute.xlu0 %1051
      %v1053 = vsel %vm661, %v1050, %v1052
      %v1054 = vsel %vm661, %v1052, %v1050
      %v1057 = vrot.slane %v1018, 4
      %v1058 = vrot.slane %v1017, 4
      %v1063 = vrot.slane %v1030, 4
      %v1064 = vrot.slane %v1029, 4
      %v1069 = vrot.slane %v1035, 4
      %v1070 = vrot.slane %v1036, 4
      %v1075 = vrot.slane %v1047, 4
      %v1076 = vrot.slane %v1048, 4
      %v1079 = vsel %vm512, %v1012, %v1057
      %v1080 = vsel %vm512, %v1011, %v1058
      %v1081 = vsel %vm512, %v1024, %v1063
      %v1082 = vsel %vm512, %v1023, %v1064
      %v1083 = vsel %vm512, %v1005, %v1069
      %v1084 = vsel %vm512, %v1006, %v1070
      %v1085 = vsel %vm512, %v1041, %v1075
      %v1086 = vsel %vm512, %v1042, %v1076
      %v1087 = vmul.f32 %v1079, %v469
      %v1088 = vmul.f32 %v1080, %v470
      %v1089 = vmul.f32 %v1081, %v471
      %v1090 = vmul.f32 %v1082, %v472
      %v1091 = vmul.f32 %v1083, %v473
      %v1092 = vmul.f32 %v1084, %v474
      %v1093 = vmul.f32 %v1085, %v475
      %v1094 = vmul.f32 %v1086, %v476
      %v1095 = vmul.f32 %v1053, %v477
      %v1096 = vmul.f32 %v1054, %v478
      %v1097 = vld [vmem:[%s10] sm:$0xf]
      %v1098 = vld [vmem:[%s11] sm:$0xf]
      %1100 = vset.pattern.permute.xlu0 0
      %1101 = vperm.xlu0 %1100, %v1098
      %v1102 = vpop.permute.xlu0 %1101
      %v1105 = vsel %vm713, %v1097, 0
      %v1108 = vsel %vm512, %v1095, 0
      %v1111 = vsel %vm512, %v1096, 0
      %1113 = vmatprep.subr.mxu0 %v1088
      %1114 = vmatpush1.msra.mxu0 %v1087
      %1115 = vmatprep.subr.mxu0 %v1090
      %1116 = vmatpush1.msra.mxu0 %v1089
      %1117 = vmatprep.subr.mxu0 %v1092
      %1118 = vmatpush1.msra.mxu0 %v1091
      %1119 = vmatprep.subr.mxu0 %v1094
      %1120 = vmatpush1.msra.mxu0 %v1093
      %1121 = vmatprep.subr.mxu0 %v1111
      %1122 = vmatpush1.msra.mxu0 %v1108
      %1123 = vmatprep.subr.mxu0 0.0
      %1124 = vmatpush1.msra.mxu0 0.0
      %1125 = vmatprep.subr.mxu0 0.0
      %1126 = vmatpush1.msra.mxu0 0.0
      %1127 = vmatprep.subr.mxu0 0.0
      %1128 = vmatpush1.msra.mxu0 0.0
      %1129 = vmatprep.subr.mxu0 0.0
      %1130 = vmatpush1.msra.mxu0 0.0
      %1131 = vmatprep.subr.mxu0 0.0
      %1132 = vmatpush1.msra.mxu0 0.0
      %1133 = vmatprep.subr.mxu0 0.0
      %1134 = vmatpush1.msra.mxu0 0.0
      %1135 = vmatprep.subr.mxu0 0.0
      %1136 = vmatpush1.msra.mxu0 0.0
      %1137 = vmatprep.subr.mxu0 0.0
      %1138 = vmatpush1.msra.mxu0 0.0
      %1139 = vmatprep.subr.mxu0 0.0
      %1140 = vmatpush1.msra.mxu0 0.0
      %1141 = vmatprep.subr.mxu0 0.0
      %1142 = vmatpush1.msra.mxu0 0.0
      %1143 = vmatprep.subr.mxu0 0.0
      %1144 = vmatpush1.msra.mxu0 0.0
      %1145 = vmatprep.subr.mxu0 0.0
      %1146 = vmatpush1.msra.mxu0 0.0
      %1147 = vmatprep.subr.mxu0 0.0
      %1148 = vmatpush1.msra.mxu0 0.0
      %1149 = vmatprep.subr.mxu0 0.0
      %1150 = vmatpush1.msra.mxu0 0.0
      %1151 = vmatprep.subr.mxu0 0.0
      %1152 = vmatpush1.msra.mxu0 0.0
      %1153 = vmatprep.subr.mxu0 0.0
      %1154 = vmatpush1.msra.mxu0 0.0
      %1155 = vmatprep.subr.mxu0 0.0
      %1156 = vmatpush1.msra.mxu0 0.0
      %1157 = vmatprep.subr.mxu0 0.0
      %1158 = vmatpush1.msra.mxu0 0.0
      %1159 = vmatprep.subr.mxu0 0.0
      %1160 = vmatpush1.msra.mxu0 0.0
      %1161 = vmatprep.subr.mxu0 0.0
      %1162 = vmatpush1.msra.mxu0 0.0
      %1163 = vmatprep.subr.mxu0 0.0
      %1164 = vmatpush1.msra.mxu0 0.0
      %1165 = vmatprep.subr.mxu0 0.0
      %1166 = vmatpush1.msra.mxu0 0.0
      %1167 = vmatprep.subr.mxu0 0.0
      %1168 = vmatpush1.msra.mxu0 0.0
      %1169 = vmatprep.subr.mxu0 0.0
      %1170 = vmatpush1.msra.mxu0 0.0
      %1171 = vmatprep.subr.mxu0 0.0
      %1172 = vmatpush1.msra.mxu0 0.0
      %1173 = vmatprep.subr.mxu0 0.0
      %1174 = vmatpush1.msra.mxu0 0.0
      %1175 = vmatprep.subr.mxu0 0.0
      %1176 = vmatpush1.msra.mxu0 0.0
      %1177 = vmatprep.mubr.f32.mxu0 0.0
      %1178 = vmatmul.mubr.f32.gmra.mrb[0].mxu0 %v1105
      %v1179 = vpop.f32.mrb[0].mxu0
      %v1180 = vadd.f32 %v1102, %v1179
      %v1181 = vpop.f32.mrb[0].mxu0
      %v1182 = vadd.f32 %v1102, %v1181
      %1183 = vdwg.mxu0
      %vm1184 = vcmp.ge.f32.partialorder %v1180, 0.0
      %vm1185 = vcmp.ge.f32.partialorder %v1182, 0.0
      %v1186 = vmul.f32 %v1180, 0.01
      %v1187 = vmul.f32 %v1182, 0.01
      %v1188 = vsel %vm1184, %v1180, %v1186
      %v1189 = vsel %vm1185, %v1182, %v1187
      %v1190 = vld [vmem:[%s12] sm:$0xff]
      %v1191 = vld [vmem:[%s12 + $0x8] sm:$0xff]
      %v1192 = vld [vmem:[%s13] sm:$0xff]
      %v1193 = vld [vmem:[%s13 + $0x8] sm:$0xff]
      %1195 = vset.pattern.permute.xlu0 0
      %1196 = vperm.xlu0 %1195, %v1192
      %v1197 = vpop.permute.xlu0 %1196
      %1200 = vset.pattern.permute.xlu0 0
      %1201 = vperm.xlu0 %1200, %v1193
      %v1202 = vpop.permute.xlu0 %1201
      %v1205 = vsel %vm502, %v1190, 0
      %v1208 = vsel %vm502, %v1191, 0
      %v1211 = vsel %vm512, %v1188, 0
      %v1214 = vsel %vm512, %v1189, 0
      %1216 = vmatprep.subr.mxu0 %v1214
      %1217 = vmatpush1.msra.mxu0 %v1211
      %1218 = vmatprep.subr.mxu0 0.0
      %1219 = vmatpush1.msra.mxu0 0.0
      %1220 = vmatprep.subr.mxu0 0.0
      %1221 = vmatpush1.msra.mxu0 0.0
      %1222 = vmatprep.subr.mxu0 0.0
      %1223 = vmatpush1.msra.mxu0 0.0
      %1224 = vmatprep.subr.mxu0 0.0
      %1225 = vmatpush1.msra.mxu0 0.0
      %1226 = vmatprep.subr.mxu0 0.0
      %1227 = vmatpush1.msra.mxu0 0.0
      %1228 = vmatprep.subr.mxu0 0.0
      %1229 = vmatpush1.msra.mxu0 0.0
      %1230 = vmatprep.subr.mxu0 0.0
      %1231 = vmatpush1.msra.mxu0 0.0
      %1232 = vmatprep.subr.mxu0 0.0
      %1233 = vmatpush1.msra.mxu0 0.0
      %1234 = vmatprep.subr.mxu0 0.0
      %1235 = vmatpush1.msra.mxu0 0.0
      %1236 = vmatprep.subr.mxu0 0.0
      %1237 = vmatpush1.msra.mxu0 0.0
      %1238 = vmatprep.subr.mxu0 0.0
      %1239 = vmatpush1.msra.mxu0 0.0
      %1240 = vmatprep.subr.mxu0 0.0
      %1241 = vmatpush1.msra.mxu0 0.0
      %1242 = vmatprep.subr.mxu0 0.0
      %1243 = vmatpush1.msra.mxu0 0.0
      %1244 = vmatprep.subr.mxu0 0.0
      %1245 = vmatpush1.msra.mxu0 0.0
      %1246 = vmatprep.subr.mxu0 0.0
      %1247 = vmatpush1.msra.mxu0 0.0
      %1248 = vmatprep.subr.mxu0 0.0
      %1249 = vmatpush1.msra.mxu0 0.0
      %1250 = vmatprep.subr.mxu0 0.0
      %1251 = vmatpush1.msra.mxu0 0.0
      %1252 = vmatprep.subr.mxu0 0.0
      %1253 = vmatpush1.msra.mxu0 0.0
      %1254 = vmatprep.subr.mxu0 0.0
      %1255 = vmatpush1.msra.mxu0 0.0
      %1256 = vmatprep.subr.mxu0 0.0
      %1257 = vmatpush1.msra.mxu0 0.0
      %1258 = vmatprep.subr.mxu0 0.0
      %1259 = vmatpush1.msra.mxu0 0.0
      %1260 = vmatprep.subr.mxu0 0.0
      %1261 = vmatpush1.msra.mxu0 0.0
      %1262 = vmatprep.subr.mxu0 0.0
      %1263 = vmatpush1.msra.mxu0 0.0
      %1264 = vmatprep.subr.mxu0 0.0
      %1265 = vmatpush1.msra.mxu0 0.0
      %1266 = vmatprep.subr.mxu0 0.0
      %1267 = vmatpush1.msra.mxu0 0.0
      %1268 = vmatprep.subr.mxu0 0.0
      %1269 = vmatpush1.msra.mxu0 0.0
      %1270 = vmatprep.subr.mxu0 0.0
      %1271 = vmatpush1.msra.mxu0 0.0
      %1272 = vmatprep.subr.mxu0 0.0
      %1273 = vmatpush1.msra.mxu0 0.0
      %1274 = vmatprep.subr.mxu0 0.0
      %1275 = vmatpush1.msra.mxu0 0.0
      %1276 = vmatprep.subr.mxu0 0.0
      %1277 = vmatpush1.msra.mxu0 0.0
      %1278 = vmatprep.subr.mxu0 0.0
      %1279 = vmatpush1.msra.mxu0 0.0
      %1280 = vmatprep.mubr.f32.mxu0 0.0
      %1281 = vmatmul.mubr.f32.gmra.mrb[0].mxu0 %v1205
      %v1282 = vpop.f32.mrb[0].mxu0
      %v1283 = vadd.f32 %v1197, %v1282
      %v1284 = vpop.f32.mrb[0].mxu0
      %v1285 = vadd.f32 %v1197, %v1284
      %1286 = vmatprep.mubr.f32.mxu0 0.0
      %1287 = vmatmul.mubr.f32.gmra.mrb[0].mxu0 %v1208
      %v1288 = vpop.f32.mrb[0].mxu0
      %v1289 = vadd.f32 %v1202, %v1288
      %v1290 = vpop.f32.mrb[0].mxu0
      %v1291 = vadd.f32 %v1202, %v1290
      %1292 = vdwg.mxu0
      %v1293 = vadd.f32 %v1283, %v915
      %v1294 = vadd.f32 %v1285, %v916
      %v1295 = vadd.f32 %v1289, %v917
      %v1296 = vadd.f32 %v1291, %v918
      %vm1297 = vcmp.ge.f32.partialorder %v1293, 0.0
      %vm1298 = vcmp.ge.f32.partialorder %v1294, 0.0
      %vm1299 = vcmp.ge.f32.partialorder %v1295, 0.0
      %vm1300 = vcmp.ge.f32.partialorder %v1296, 0.0
      %v1301 = vmul.f32 %v1293, 0.01
      %v1302 = vmul.f32 %v1294, 0.01
      %v1303 = vmul.f32 %v1295, 0.01
      %v1304 = vmul.f32 %v1296, 0.01
      %v1305 = vsel %vm1297, %v1293, %v1301
      %v1306 = vsel %vm1298, %v1294, %v1302
      %v1307 = vsel %vm1299, %v1295, %v1303
      %v1308 = vsel %vm1300, %v1296, %v1304
      %1309 = vst [vmem:[%s467] sm:$0xff] %v1305
      %1310 = vst [vmem:[%s467 + $0x8] sm:$0xff] %v1306
      %1311 = vst [vmem:[%s467 + $0x10] sm:$0xff] %v1307
      %1312 = vst [vmem:[%s467 + $0x18] sm:$0xff] %v1308
      %p1313 = scmp.lt.s32.totalorder %s25, 1
      %s1314 = scalar_select %p1313, %s25, 1
      %s1315 = smul.addr %s1314, 4
      %s1316 = smul.addr %s1315, 8
      %s1317 = scalar_lea.vmem %s14, %s1316
      // Predicated region
      $region77: #{conv_trans_block_forward.1} parent=75 // pred_check
        %p1318 = pneg %p342
      $region78: #{conv_trans_block_forward.1} parent=75 // pred_check_branch
        %1320 = sbr.rel (%p1318) target = $region80
      $region79: #{conv_trans_block_forward.1} parent=75 // pred_region
        _
      $region80: #{conv_trans_block_forward.1} parent=75 // pred_fallthru
        _
    $region76: #{conv_trans_block_forward.1} parent=5 // pred_fallthru
      _
    %p1321 = scmp.le.s32.totalorder 2, %s20
    // Predicated region
    $region81: #{conv_trans_block_forward.1} parent=5 // pred_check
      %p1322 = pneg %p1321
    $region82: #{conv_trans_block_forward.1} parent=5 // pred_check_branch
      %1324 = sbr.rel (%p1322) target = $region84
    $region83: #{conv_trans_block_forward.1} parent=5 // pred_region
      %s1325 = ssub.s32 %s20, 2
      // Predicated region
      $region85: #{conv_trans_block_forward.1} parent=83 // pred_check
        %p1326 = pneg %p348
      $region86: #{conv_trans_block_forward.1} parent=83 // pred_check_branch
        %1328 = sbr.rel (%p1326) target = $region88
      $region87: #{conv_trans_block_forward.1} parent=83 // pred_region
        %p1329 = scmp.lt.s32.totalorder %s26, 1
        %s1330 = scalar_select %p1329, %s26, 1
        %s1331 = smul.addr %s1330, 4
        %s1332 = smul.addr %s1331, 8
        %s1333 = scalar_lea.vmem %s14, %s1332
      $region88: #{conv_trans_block_forward.1} parent=83 // pred_fallthru
        _
    $region84: #{conv_trans_block_forward.1} parent=5 // pred_fallthru
      _
  $region6: #{conv_trans_block_forward.1} parent=0 // loop_footer
    %s24 = sadd.s32 1, %s20
  $region7: #{conv_trans_block_forward.1} parent=0 // loop_footer_branch
    %19 = sbr.rel target = $region3
  $region8: #{conv_trans_block_forward.1} parent=0 // loop_exit
    _

</llo_original>
